<compile_context>
chip_gen: v7x
topology: tpu7x:2x2x1
jax: 0.10.0
libtpu: 0.0.40
codegen_flags: <defaults>
</compile_context>

<pallas_src>
import functools

import jax
import jax.numpy as jnp
from jax.experimental import pallas as pl
from jax.experimental.pallas import tpu as pltpu


def _round_up(n, m):
    return (n + m - 1) // m * m


# ------------------------------ Fused kernel ------------------------------- #

def _vae_fused_kernel(*refs, z_dim, with_label):
    f32 = jnp.float32
    bf16 = jnp.bfloat16

    if with_label:
        (x_ref, eps_ref, c_ref,
         w1_ref, b1_ref, w2_ref, b2_ref, w3_ref, b3_ref,
         w4z_ref, w4c_ref, b4_ref, w5_ref, b5_ref, w6_ref, b6_ref,
         head_ref, recon_ref) = refs
    else:
        (x_ref, eps_ref,
         w1_ref, b1_ref, w2_ref, b2_ref, w3_ref, b3_ref,
         w4z_ref, b4_ref, w5_ref, b5_ref, w6_ref, b6_ref,
         head_ref, recon_ref) = refs
        c_ref = None
        w4c_ref = None

    # ---- encoder ----
    x = x_ref[...].astype(bf16)                       # f32 in HBM, bf16 on MXU
    h = jnp.dot(x, w1_ref[...], preferred_element_type=f32) + b1_ref[...]
    h = jnp.maximum(h, 0.0)
    h = jnp.dot(h.astype(bf16), w2_ref[...], preferred_element_type=f32) + b2_ref[...]
    h = jnp.maximum(h, 0.0)
    # fused fc31|fc32 head: kept in f32 (tiny matmul) for logvar precision,
    # zero-padded to a lane-dense 128-wide tile.
    head = jnp.dot(h, w3_ref[...], preferred_element_type=f32) + b3_ref[...]
    head_ref[...] = head

    # ---- reparameterization: z = eps * exp(0.5 * logvar) + mu ----
    mu = head[:, :z_dim]
    log_var = head[:, z_dim:2 * z_dim]
    z = eps_ref[...] * jnp.exp(0.5 * log_var) + mu

    # ---- decoder (conditional concat folded into a split matmul) ----
    h = jnp.dot(z.astype(bf16), w4z_ref[...], preferred_element_type=f32) + b4_ref[...]
    if with_label:
        h = h + jnp.dot(c_ref[...].astype(bf16), w4c_ref[...],
                        preferred_element_type=f32)
    h = jnp.maximum(h, 0.0)
    h = jnp.dot(h.astype(bf16), w5_ref[...], preferred_element_type=f32) + b5_ref[...]
    h = jnp.maximum(h, 0.0)
    logits = jnp.dot(h.astype(bf16), w6_ref[...], preferred_element_type=f32) + b6_ref[...]
    recon_ref[...] = jax.nn.sigmoid(logits).astype(recon_ref.dtype)   # bf16 store


# --------------------------- Parameter construction ------------------------ #

def _init_linear(key, in_dim, out_dim):
    # mimic torch.nn.Linear default init: U(-1/sqrt(in), 1/sqrt(in))
    kw, kb = jax.random.split(key)
    bound = 1.0 / jnp.sqrt(jnp.float32(in_dim))
    w = jax.random.uniform(kw, (in_dim, out_dim), jnp.float32, -bound, bound)
    b = jax.random.uniform(kb, (1, out_dim), jnp.float32, -bound, bound)
    return w, b


def make_vae_params(key, x_dim, h_dim1, h_dim2, z_dim, conditional=0):
    """Raw f32 parameters, weights stored (in_features, out_features)."""
    num_labels = 10 if conditional > 0 else 0
    z_dim_ = z_dim + (num_labels if conditional > 0 else 0)
    x_dim_ = x_dim + (num_labels if conditional > 1 else 0)
    keys = jax.random.split(key, 7)
    p = {}
    p["w1"], p["b1"] = _init_linear(keys[0], x_dim_, h_dim1)
    p["w2"], p["b2"] = _init_linear(keys[1], h_dim1, h_dim2)
    p["w31"], p["b31"] = _init_linear(keys[2], h_dim2, z_dim)
    p["w32"], p["b32"] = _init_linear(keys[3], h_dim2, z_dim)
    p["w4"], p["b4"] = _init_linear(keys[4], z_dim_, h_dim2)
    p["w5"], p["b5"] = _init_linear(keys[5], h_dim2, h_dim1)
    p["w6"], p["b6"] = _init_linear(keys[6], h_dim1, x_dim)
    return p


def prepare_kernel_params(raw, x_dim, z_dim, conditional=0):
    """One-time packing: bf16 matmul weights / f32 biases, fc31|fc32 fused into
    one f32 head padded to 128 lanes, fc4 split into (z rows | one-hot rows).
    No K/N padding of fc1 / fc6 (the kernel reads/writes true-width blocks)."""
    bf16 = jnp.bfloat16
    f32 = jnp.float32
    h2 = raw["w2"].shape[1]
    HEAD = _round_up(2 * z_dim, 128)

    kp = {}
    kp["w1"] = raw["w1"].astype(bf16)
    kp["b1"] = raw["b1"].astype(f32)
    kp["w2"] = raw["w2"].astype(bf16)
    kp["b2"] = raw["b2"].astype(f32)

    w3 = jnp.concatenate([raw["w31"], raw["w32"]], axis=1)
    b3 = jnp.concatenate([raw["b31"], raw["b32"]], axis=1)
    kp["w3"] = jnp.zeros((h2, HEAD), f32).at[:, :2 * z_dim].set(w3)   # f32 head
    kp["b3"] = jnp.zeros((1, HEAD), f32).at[:, :2 * z_dim].set(b3)

    if conditional > 0:
        kp["w4z"] = raw["w4"][:z_dim].astype(bf16)
        kp["w4c"] = raw["w4"][z_dim:].astype(bf16)
    else:
        kp["w4z"] = raw["w4"].astype(bf16)        # no w4c / no label input
    kp["b4"] = raw["b4"].astype(f32)
    kp["w5"] = raw["w5"].astype(bf16)
    kp["b5"] = raw["b5"].astype(f32)
    kp["w6"] = raw["w6"].astype(bf16)             # (h1, 784), no column pad
    kp["b6"] = raw["b6"].astype(f32)
    return kp


# ------------------------------- Forward glue ------------------------------ #

def idx2onehot(idx, n=10):
    idx = idx.reshape(-1)
    return jax.nn.one_hot(idx, n, dtype=jnp.float32)


def _choose_bm(B):
    # Small batch: a single grid step with block == full array (legal, no host
    # row padding).  Larger batch: >=2 steps of >=64 rows so both v7x
    # TensorCores get work, capped at 512 rows/step so double-buffered
    # (bm, 784) f32-in / bf16-out tiles stay under v5e's 16 MiB scoped VMEM.
    if B < 128:
        return B
    return min(512, _round_up((B + 1) // 2, 8))


@functools.partial(jax.jit, static_argnames=("conditional",))
def vae_forward(kparams, x, c, eps, conditional=0):
    f32 = jnp.float32
    bf16 = jnp.bfloat16

    x = x.reshape(-1, 784).astype(f32)
    B = x.shape[0]
    z_dim = eps.shape[1]
    eps = eps.astype(f32)

    c1h = idx2onehot(c, 10) if conditional > 0 else None
    if conditional > 1:
        x = jnp.concatenate([x, c1h], axis=-1)
    K = x.shape[1]

    h1 = kparams["w1"].shape[1]
    h2 = kparams["w2"].shape[1]
    HEAD = kparams["w3"].shape[1]
    x_dim = kparams["w6"].shape[1]

    bm = _choose_bm(B)
    B_pad = _round_up(B, bm)
    grid = (B_pad // bm,)

    if B_pad != B:                              # only when B >= 128 and ragged
        pad = B_pad - B
        x = jnp.pad(x, ((0, pad), (0, 0)))
        eps = jnp.pad(eps, ((0, pad), (0, 0)))
        if conditional > 0:
            c1h = jnp.pad(c1h, ((0, pad), (0, 0)))

    def row_spec(feat):
        return pl.BlockSpec((bm, feat), lambda i: (i, 0))

    def full_spec(arr):
        return pl.BlockSpec(arr.shape, lambda i: (0, 0))

    weight_args = [kparams["w1"], kparams["b1"], kparams["w2"], kparams["b2"],
                   kparams["w3"], kparams["b3"], kparams["w4z"]]
    if conditional > 0:
        weight_args.append(kparams["w4c"])
    weight_args += [kparams["b4"], kparams["w5"], kparams["b5"],
                    kparams["w6"], kparams["b6"]]

    data_args = [x, eps]
    data_specs = [row_spec(K), row_spec(z_dim)]
    if conditional > 0:
        data_args.append(c1h)
        data_specs.append(row_spec(10))

    in_specs = data_specs + [full_spec(a) for a in weight_args]
    out_specs = (row_spec(HEAD), row_spec(x_dim))
    out_shape = (jax.ShapeDtypeStruct((B_pad, HEAD), f32),
                 jax.ShapeDtypeStruct((B_pad, x_dim), bf16))

    weight_bytes = int(sum(a.size * a.dtype.itemsize for a in weight_args))
    flops = 2 * B_pad * (K * h1 + h1 * h2 + h2 * HEAD + z_dim * h2
                         + (10 * h2 if conditional > 0 else 0)
                         + h2 * h1 + h1 * x_dim)
    per_row_bytes = (K * 4 + z_dim * 4 + (10 * 4 if conditional > 0 else 0)
                     + HEAD * 4 + x_dim * 2)
    cost = pl.CostEstimate(
        flops=flops,
        transcendentals=B_pad * (z_dim + x_dim),
        bytes_accessed=weight_bytes + B_pad * per_row_bytes)

    head, recon_p = pl.pallas_call(
        functools.partial(_vae_fused_kernel, z_dim=z_dim,
                          with_label=conditional > 0),
        grid=grid,
        in_specs=in_specs,
        out_specs=out_specs,
        out_shape=out_shape,
        compiler_params=pltpu.CompilerParams(
            dimension_semantics=("parallel",),
            vmem_limit_bytes=32 * 1024 * 1024),
        cost_estimate=cost,
    )(*data_args, *weight_args)

    mu = head[:B, :z_dim]
    log_var = head[:B, z_dim:2 * z_dim]
    recon = recon_p if B_pad == B else recon_p[:B]   # bf16, exact (B, 784)
    return recon, mu, log_var


# Pure-JAX f32 reference for verification (matches the PyTorch module exactly).
def vae_forward_ref(raw, x, c, eps, conditional=0):
    x = x.reshape(-1, 784).astype(jnp.float32)
    c1h = idx2onehot(c, 10)
    if conditional > 1:
        x = jnp.concatenate([x, c1h], axis=-1)
    h = jax.nn.relu(x @ raw["w1"] + raw["b1"])
    h = jax.nn.relu(h @ raw["w2"] + raw["b2"])
    mu = h @ raw["w31"] + raw["b31"]
    lv = h @ raw["w32"] + raw["b32"]
    z = eps * jnp.exp(0.5 * lv) + mu
    if conditional > 0:
        z = jnp.concatenate([z, c1h], axis=-1)
    h = jax.nn.relu(z @ raw["w4"] + raw["b4"])
    h = jax.nn.relu(h @ raw["w5"] + raw["b5"])
    recon = jax.nn.sigmoid(h @ raw["w6"] + raw["b6"])
    return recon, mu, lv


# ----------------------------------- Main ---------------------------------- #

if __name__ == "__main__":
    key = jax.random.PRNGKey(0)

    B = 2
    x_dim, h_dim1, h_dim2, z_dim = 784, 256, 128, 32

    for conditional in (0, 1, 2):
        k_param, k_x, k_c, k_eps = jax.random.split(
            jax.random.fold_in(key, conditional), 4)

        raw = make_vae_params(k_param, x_dim, h_dim1, h_dim2, z_dim, conditional)
        kparams = prepare_kernel_params(raw, x_dim, z_dim, conditional)

        x = jax.random.normal(k_x, (B, 1, 28, 28), jnp.float32)   # flattened to (B, 784)
        c = jax.random.randint(k_c, (B,), 0, 10, jnp.int32)       # labels for idx2onehot
        assert int(jnp.max(c)) < 10                                # torch assert in idx2onehot
        # TODO(synk): eps could be drawn in-kernel via pltpu.prng_* (saves its DMA),
        # but it is passed in here to keep exact parity with the reference.
        eps = jax.random.normal(k_eps, (B, z_dim), jnp.float32)    # randn_like(std)

        recon, mu, log_var = vae_forward(kparams, x, c, eps, conditional=conditional)
        jax.block_until_ready((recon, mu, log_var))

        r_ref, mu_ref, lv_ref = vae_forward_ref(raw, x, c, eps, conditional)

        assert recon.shape == (B, 784)
        assert mu.shape == (B, z_dim) and log_var.shape == (B, z_dim)
        # bf16 matmul operands (encoder/decoder) + bf16 recon store -> compare
        # against the f32 reference with loosened tolerance.
        assert jnp.allclose(mu, mu_ref, atol=5e-2, rtol=5e-2)
        assert jnp.allclose(log_var, lv_ref, atol=5e-2, rtol=5e-2)
        assert jnp.allclose(recon.astype(jnp.float32), r_ref, atol=5e-2, rtol=5e-2)

    print("KERNEL_OK")
</pallas_src>

<mosaic_0001>
module attributes {stable_mosaic.version = 11 : i64} {
  func.func @_vae_fused_kernel(%arg0: i32, %arg1: memref<2x784xf32, #tpu.memory_space<vmem>>, %arg2: memref<2x32xf32, #tpu.memory_space<vmem>>, %arg3: memref<784x256xbf16, #tpu.memory_space<vmem>>, %arg4: memref<1x256xf32, #tpu.memory_space<vmem>>, %arg5: memref<256x128xbf16, #tpu.memory_space<vmem>>, %arg6: memref<1x128xf32, #tpu.memory_space<vmem>>, %arg7: memref<128x128xf32, #tpu.memory_space<vmem>>, %arg8: memref<1x128xf32, #tpu.memory_space<vmem>>, %arg9: memref<32x128xbf16, #tpu.memory_space<vmem>>, %arg10: memref<1x128xf32, #tpu.memory_space<vmem>>, %arg11: memref<128x256xbf16, #tpu.memory_space<vmem>>, %arg12: memref<1x256xf32, #tpu.memory_space<vmem>>, %arg13: memref<256x784xbf16, #tpu.memory_space<vmem>>, %arg14: memref<1x784xf32, #tpu.memory_space<vmem>>, %arg15: memref<2x128xf32, #tpu.memory_space<vmem>>, %arg16: memref<2x784xbf16, #tpu.memory_space<vmem>>) attributes {dimension_semantics = [#tpu.dimension_semantics<parallel>], iteration_bounds = array<i64: 1>, scalar_prefetch = 0 : i64, scratch_operands = 0 : i64, tpu.core_type = #tpu.core_type<tc>, window_params = [{transform_indices = @transform_0, window_bounds = array<i64: 2, 784>}, {transform_indices = @transform_1, window_bounds = array<i64: 2, 32>}, {pipeline_mode = #tpu.pipeline_mode<synchronous>, transform_indices = @transform_2, window_bounds = array<i64: 784, 256>}, {pipeline_mode = #tpu.pipeline_mode<synchronous>, transform_indices = @transform_3, window_bounds = array<i64: 1, 256>}, {pipeline_mode = #tpu.pipeline_mode<synchronous>, transform_indices = @transform_4, window_bounds = array<i64: 256, 128>}, {pipeline_mode = #tpu.pipeline_mode<synchronous>, transform_indices = @transform_5, window_bounds = array<i64: 1, 128>}, {pipeline_mode = #tpu.pipeline_mode<synchronous>, transform_indices = @transform_6, window_bounds = array<i64: 128, 128>}, {pipeline_mode = #tpu.pipeline_mode<synchronous>, transform_indices = @transform_7, window_bounds = array<i64: 1, 128>}, {pipeline_mode = #tpu.pipeline_mode<synchronous>, transform_indices = @transform_8, window_bounds = array<i64: 32, 128>}, {pipeline_mode = #tpu.pipeline_mode<synchronous>, transform_indices = @transform_9, window_bounds = array<i64: 1, 128>}, {pipeline_mode = #tpu.pipeline_mode<synchronous>, transform_indices = @transform_10, window_bounds = array<i64: 128, 256>}, {pipeline_mode = #tpu.pipeline_mode<synchronous>, transform_indices = @transform_11, window_bounds = array<i64: 1, 256>}, {pipeline_mode = #tpu.pipeline_mode<synchronous>, transform_indices = @transform_12, window_bounds = array<i64: 256, 784>}, {pipeline_mode = #tpu.pipeline_mode<synchronous>, transform_indices = @transform_13, window_bounds = array<i64: 1, 784>}, {transform_indices = @transform_14, window_bounds = array<i64: 2, 128>}, {transform_indices = @transform_15, window_bounds = array<i64: 2, 784>}]} {
    %c0 = arith.constant 0 : index
    %c0_0 = arith.constant 0 : index
    %0 = vector.load %arg1[%c0, %c0_0] : memref<2x784xf32, #tpu.memory_space<vmem>>, vector<2x784xf32>
    %1 = arith.truncf %0 : vector<2x784xf32> to vector<2x784xbf16>
    %c0_1 = arith.constant 0 : index
    %c0_2 = arith.constant 0 : index
    %2 = vector.load %arg3[%c0_1, %c0_2] : memref<784x256xbf16, #tpu.memory_space<vmem>>, vector<784x256xbf16>
    %cst = arith.constant dense<0.000000e+00> : vector<2x256xf32>
    %3 = tpu.matmul %1, %2, %cst {dimension_numbers = #tpu.dot_dimension_numbers<[1], [0], [0], [1], [0, 0, 1, 1], [], []>} : vector<2x784xbf16>, vector<784x256xbf16>, vector<2x256xf32> -> vector<2x256xf32>
    %c0_3 = arith.constant 0 : index
    %c0_4 = arith.constant 0 : index
    %4 = vector.load %arg4[%c0_3, %c0_4] : memref<1x256xf32, #tpu.memory_space<vmem>>, vector<1x256xf32>
    %5 = vector.broadcast %4 : vector<1x256xf32> to vector<2x256xf32>
    %6 = arith.addf %3, %5 : vector<2x256xf32>
    %cst_5 = arith.constant 0.000000e+00 : f32
    %7 = vector.broadcast %cst_5 : f32 to vector<2x256xf32>
    %8 = arith.maximumf %6, %7 : vector<2x256xf32>
    %9 = arith.truncf %8 : vector<2x256xf32> to vector<2x256xbf16>
    %c0_6 = arith.constant 0 : index
    %c0_7 = arith.constant 0 : index
    %10 = vector.load %arg5[%c0_6, %c0_7] : memref<256x128xbf16, #tpu.memory_space<vmem>>, vector<256x128xbf16>
    %cst_8 = arith.constant dense<0.000000e+00> : vector<2x128xf32>
    %11 = tpu.matmul %9, %10, %cst_8 {dimension_numbers = #tpu.dot_dimension_numbers<[1], [0], [0], [1], [0, 0, 1, 1], [], []>} : vector<2x256xbf16>, vector<256x128xbf16>, vector<2x128xf32> -> vector<2x128xf32>
    %c0_9 = arith.constant 0 : index
    %c0_10 = arith.constant 0 : index
    %12 = vector.load %arg6[%c0_9, %c0_10] : memref<1x128xf32, #tpu.memory_space<vmem>>, vector<1x128xf32>
    %13 = vector.broadcast %12 : vector<1x128xf32> to vector<2x128xf32>
    %14 = arith.addf %11, %13 : vector<2x128xf32>
    %cst_11 = arith.constant 0.000000e+00 : f32
    %15 = vector.broadcast %cst_11 : f32 to vector<2x128xf32>
    %16 = arith.maximumf %14, %15 : vector<2x128xf32>
    %c0_12 = arith.constant 0 : index
    %c0_13 = arith.constant 0 : index
    %17 = vector.load %arg7[%c0_12, %c0_13] : memref<128x128xf32, #tpu.memory_space<vmem>>, vector<128x128xf32>
    %cst_14 = arith.constant dense<0.000000e+00> : vector<2x128xf32>
    %18 = tpu.matmul %16, %17, %cst_14 {dimension_numbers = #tpu.dot_dimension_numbers<[1], [0], [0], [1], [0, 0, 1, 1], [], []>} : vector<2x128xf32>, vector<128x128xf32>, vector<2x128xf32> -> vector<2x128xf32>
    %c0_15 = arith.constant 0 : index
    %c0_16 = arith.constant 0 : index
    %19 = vector.load %arg8[%c0_15, %c0_16] : memref<1x128xf32, #tpu.memory_space<vmem>>, vector<1x128xf32>
    %20 = vector.broadcast %19 : vector<1x128xf32> to vector<2x128xf32>
    %21 = arith.addf %18, %20 : vector<2x128xf32>
    %c0_17 = arith.constant 0 : index
    %c0_18 = arith.constant 0 : index
    %22 = vector.load %arg15[%c0_17, %c0_18] : memref<2x128xf32, #tpu.memory_space<vmem>>, vector<2x128xf32>
    tpu.vector_store %arg15[%c0_17, %c0_18], %21 {strides = array<i32>} : memref<2x128xf32, #tpu.memory_space<vmem>>, vector<2x128xf32>,
    %23 = vector.extract_strided_slice %21 {offsets = [0, 0], sizes = [2, 32], strides = [1, 1]} : vector<2x128xf32> to vector<2x32xf32>
    %24 = vector.extract_strided_slice %21 {offsets = [0, 32], sizes = [2, 32], strides = [1, 1]} : vector<2x128xf32> to vector<2x32xf32>
    %c0_19 = arith.constant 0 : index
    %c0_20 = arith.constant 0 : index
    %25 = vector.load %arg2[%c0_19, %c0_20] : memref<2x32xf32, #tpu.memory_space<vmem>>, vector<2x32xf32>
    %cst_21 = arith.constant 5.000000e-01 : f32
    %26 = vector.broadcast %cst_21 : f32 to vector<2x32xf32>
    %27 = arith.mulf %26, %24 : vector<2x32xf32>
    %28 = math.exp %27 : vector<2x32xf32>
    %29 = arith.mulf %25, %28 : vector<2x32xf32>
    %30 = arith.addf %29, %23 : vector<2x32xf32>
    %31 = arith.truncf %30 : vector<2x32xf32> to vector<2x32xbf16>
    %c0_22 = arith.constant 0 : index
    %c0_23 = arith.constant 0 : index
    %32 = vector.load %arg9[%c0_22, %c0_23] : memref<32x128xbf16, #tpu.memory_space<vmem>>, vector<32x128xbf16>
    %cst_24 = arith.constant dense<0.000000e+00> : vector<2x128xf32>
    %33 = tpu.matmul %31, %32, %cst_24 {dimension_numbers = #tpu.dot_dimension_numbers<[1], [0], [0], [1], [0, 0, 1, 1], [], []>} : vector<2x32xbf16>, vector<32x128xbf16>, vector<2x128xf32> -> vector<2x128xf32>
    %c0_25 = arith.constant 0 : index
    %c0_26 = arith.constant 0 : index
    %34 = vector.load %arg10[%c0_25, %c0_26] : memref<1x128xf32, #tpu.memory_space<vmem>>, vector<1x128xf32>
    %35 = vector.broadcast %34 : vector<1x128xf32> to vector<2x128xf32>
    %36 = arith.addf %33, %35 : vector<2x128xf32>
    %cst_27 = arith.constant 0.000000e+00 : f32
    %37 = vector.broadcast %cst_27 : f32 to vector<2x128xf32>
    %38 = arith.maximumf %36, %37 : vector<2x128xf32>
    %39 = arith.truncf %38 : vector<2x128xf32> to vector<2x128xbf16>
    %c0_28 = arith.constant 0 : index
    %c0_29 = arith.constant 0 : index
    %40 = vector.load %arg11[%c0_28, %c0_29] : memref<128x256xbf16, #tpu.memory_space<vmem>>, vector<128x256xbf16>
    %cst_30 = arith.constant dense<0.000000e+00> : vector<2x256xf32>
    %41 = tpu.matmul %39, %40, %cst_30 {dimension_numbers = #tpu.dot_dimension_numbers<[1], [0], [0], [1], [0, 0, 1, 1], [], []>} : vector<2x128xbf16>, vector<128x256xbf16>, vector<2x256xf32> -> vector<2x256xf32>
    %c0_31 = arith.constant 0 : index
    %c0_32 = arith.constant 0 : index
    %42 = vector.load %arg12[%c0_31, %c0_32] : memref<1x256xf32, #tpu.memory_space<vmem>>, vector<1x256xf32>
    %43 = vector.broadcast %42 : vector<1x256xf32> to vector<2x256xf32>
    %44 = arith.addf %41, %43 : vector<2x256xf32>
    %cst_33 = arith.constant 0.000000e+00 : f32
    %45 = vector.broadcast %cst_33 : f32 to vector<2x256xf32>
    %46 = arith.maximumf %44, %45 : vector<2x256xf32>
    %47 = arith.truncf %46 : vector<2x256xf32> to vector<2x256xbf16>
    %c0_34 = arith.constant 0 : index
    %c0_35 = arith.constant 0 : index
    %48 = vector.load %arg13[%c0_34, %c0_35] : memref<256x784xbf16, #tpu.memory_space<vmem>>, vector<256x784xbf16>
    %cst_36 = arith.constant dense<0.000000e+00> : vector<2x784xf32>
    %49 = tpu.matmul %47, %48, %cst_36 {dimension_numbers = #tpu.dot_dimension_numbers<[1], [0], [0], [1], [0, 0, 1, 1], [], []>} : vector<2x256xbf16>, vector<256x784xbf16>, vector<2x784xf32> -> vector<2x784xf32>
    %c0_37 = arith.constant 0 : index
    %c0_38 = arith.constant 0 : index
    %50 = vector.load %arg14[%c0_37, %c0_38] : memref<1x784xf32, #tpu.memory_space<vmem>>, vector<1x784xf32>
    %51 = vector.broadcast %50 : vector<1x784xf32> to vector<2x784xf32>
    %52 = arith.addf %49, %51 : vector<2x784xf32>
    %53 = arith.negf %52 : vector<2x784xf32>
    %54 = math.exp %53 : vector<2x784xf32>
    %cst_39 = arith.constant 1.000000e+00 : f32
    %55 = vector.broadcast %cst_39 : f32 to vector<2x784xf32>
    %56 = arith.addf %55, %54 : vector<2x784xf32>
    %57 = arith.divf %55, %56 : vector<2x784xf32>
    %58 = arith.truncf %57 : vector<2x784xf32> to vector<2x784xbf16>
    %c0_40 = arith.constant 0 : index
    %c0_41 = arith.constant 0 : index
    %59 = vector.load %arg16[%c0_40, %c0_41] : memref<2x784xbf16, #tpu.memory_space<vmem>>, vector<2x784xbf16>
    tpu.vector_store %arg16[%c0_40, %c0_41], %58 {strides = array<i32>} : memref<2x784xbf16, #tpu.memory_space<vmem>>, vector<2x784xbf16>,
    return
  }
  func.func @transform_0(%arg0: i32) -> (i32, i32) {
    %c0_i32 = arith.constant 0 : i32
    %c0_i32_0 = arith.constant 0 : i32
    return %arg0, %c0_i32 : i32, i32
  }
  func.func @transform_1(%arg0: i32) -> (i32, i32) {
    %c0_i32 = arith.constant 0 : i32
    %c0_i32_0 = arith.constant 0 : i32
    return %arg0, %c0_i32 : i32, i32
  }
  func.func @transform_2(%arg0: i32) -> (i32, i32) {
    %c0_i32 = arith.constant 0 : i32
    %c0_i32_0 = arith.constant 0 : i32
    %c0_i32_1 = arith.constant 0 : i32
    return %c0_i32, %c0_i32_0 : i32, i32
  }
  func.func @transform_3(%arg0: i32) -> (i32, i32) {
    %c0_i32 = arith.constant 0 : i32
    %c0_i32_0 = arith.constant 0 : i32
    %c0_i32_1 = arith.constant 0 : i32
    return %c0_i32, %c0_i32_0 : i32, i32
  }
  func.func @transform_4(%arg0: i32) -> (i32, i32) {
    %c0_i32 = arith.constant 0 : i32
    %c0_i32_0 = arith.constant 0 : i32
    %c0_i32_1 = arith.constant 0 : i32
    return %c0_i32, %c0_i32_0 : i32, i32
  }
  func.func @transform_5(%arg0: i32) -> (i32, i32) {
    %c0_i32 = arith.constant 0 : i32
    %c0_i32_0 = arith.constant 0 : i32
    %c0_i32_1 = arith.constant 0 : i32
    return %c0_i32, %c0_i32_0 : i32, i32
  }
  func.func @transform_6(%arg0: i32) -> (i32, i32) {
    %c0_i32 = arith.constant 0 : i32
    %c0_i32_0 = arith.constant 0 : i32
    %c0_i32_1 = arith.constant 0 : i32
    return %c0_i32, %c0_i32_0 : i32, i32
  }
  func.func @transform_7(%arg0: i32) -> (i32, i32) {
    %c0_i32 = arith.constant 0 : i32
    %c0_i32_0 = arith.constant 0 : i32
    %c0_i32_1 = arith.constant 0 : i32
    return %c0_i32, %c0_i32_0 : i32, i32
  }
  func.func @transform_8(%arg0: i32) -> (i32, i32) {
    %c0_i32 = arith.constant 0 : i32
    %c0_i32_0 = arith.constant 0 : i32
    %c0_i32_1 = arith.constant 0 : i32
    return %c0_i32, %c0_i32_0 : i32, i32
  }
  func.func @transform_9(%arg0: i32) -> (i32, i32) {
    %c0_i32 = arith.constant 0 : i32
    %c0_i32_0 = arith.constant 0 : i32
    %c0_i32_1 = arith.constant 0 : i32
    return %c0_i32, %c0_i32_0 : i32, i32
  }
  func.func @transform_10(%arg0: i32) -> (i32, i32) {
    %c0_i32 = arith.constant 0 : i32
    %c0_i32_0 = arith.constant 0 : i32
    %c0_i32_1 = arith.constant 0 : i32
    return %c0_i32, %c0_i32_0 : i32, i32
  }
  func.func @transform_11(%arg0: i32) -> (i32, i32) {
    %c0_i32 = arith.constant 0 : i32
    %c0_i32_0 = arith.constant 0 : i32
    %c0_i32_1 = arith.constant 0 : i32
    return %c0_i32, %c0_i32_0 : i32, i32
  }
  func.func @transform_12(%arg0: i32) -> (i32, i32) {
    %c0_i32 = arith.constant 0 : i32
    %c0_i32_0 = arith.constant 0 : i32
    %c0_i32_1 = arith.constant 0 : i32
    return %c0_i32, %c0_i32_0 : i32, i32
  }
  func.func @transform_13(%arg0: i32) -> (i32, i32) {
    %c0_i32 = arith.constant 0 : i32
    %c0_i32_0 = arith.constant 0 : i32
    %c0_i32_1 = arith.constant 0 : i32
    return %c0_i32, %c0_i32_0 : i32, i32
  }
  func.func @transform_14(%arg0: i32) -> (i32, i32) {
    %c0_i32 = arith.constant 0 : i32
    %c0_i32_0 = arith.constant 0 : i32
    return %arg0, %c0_i32 : i32, i32
  }
  func.func @transform_15(%arg0: i32) -> (i32, i32) {
    %c0_i32 = arith.constant 0 : i32
    %c0_i32_0 = arith.constant 0 : i32
    return %arg0, %c0_i32 : i32, i32
  }
}

</mosaic_0001>

<llo_original>
// kernel: vae_forward.1
$region0: #{vae_forward.1}
  #allocation0 [shape = 'u32[]', space=smem, size = 0x4, offset = 0x4, fixed_abs, tag = 'smem constant byte address 0x4 - core index']
  #allocation1 [shape = 'u32[144,128]{1,0:T(1,128)}', space=vmem, size = 0x12000, scoped, tag = 'internal scratch']
  %s0 = inlined_call_operand.vmem [shape: f32[2,784], index: 0, kind: input, shape index: {}]
  %s1 = inlined_call_operand.vmem [shape: f32[2,32], index: 1, kind: input, shape index: {}]
  %s2 = inlined_call_operand.vmem [shape: bf16[784,256], index: 2, kind: input, shape index: {}]
  %s3 = inlined_call_operand.vmem [shape: f32[1,256], index: 3, kind: input, shape index: {}]
  %s4 = inlined_call_operand.vmem [shape: bf16[256,128], index: 4, kind: input, shape index: {}]
  %s5 = inlined_call_operand.vmem [shape: f32[1,128], index: 5, kind: input, shape index: {}]
  %s6 = inlined_call_operand.vmem [shape: f32[128,128], index: 6, kind: input, shape index: {}]
  %s7 = inlined_call_operand.vmem [shape: f32[1,128], index: 7, kind: input, shape index: {}]
  %s8 = inlined_call_operand.vmem [shape: bf16[32,128], index: 8, kind: input, shape index: {}]
  %s9 = inlined_call_operand.vmem [shape: f32[1,128], index: 9, kind: input, shape index: {}]
  %s10 = inlined_call_operand.vmem [shape: bf16[128,256], index: 10, kind: input, shape index: {}]
  %s11 = inlined_call_operand.vmem [shape: f32[1,256], index: 11, kind: input, shape index: {}]
  %s12 = inlined_call_operand.vmem [shape: bf16[256,784], index: 12, kind: input, shape index: {}]
  %s13 = inlined_call_operand.vmem [shape: f32[1,784], index: 13, kind: input, shape index: {}]
  %s14 = inlined_call_operand.vmem [shape: f32[2,128], index: 14, kind: output, shape index: {0}]
  %s15 = inlined_call_operand.hbm [shape: bf16[2,784], index: 15, kind: output, shape index: {1}]
  %16 = xla_tuple %s14, %s15
  %s17 = sld [smem:[#allocation0]]
  $region74: #{vae_forward.1} parent=0
    _
  %s19 = ssub.s32 1, %s17
  %s20 = scalar_select 0, %s19, %s17
  $region1: #{vae_forward.1} parent=0
    #allocation2 [shape = 'u8[3584]{0}', space=vmem, size = 0x1000, scoped, tag = 'output window, operand 1, single buffered']
    #allocation3 [shape = 's32[1]{0}', space=sflag, size = 0x4, scoped, tag = 'scoped memory for vae_forward.1']
    %21 = vsyncpa [#allocation3], 0
    // Predicated region
    $region2: #{vae_forward.1} parent=1 // pred_check
      _
    $region3: #{vae_forward.1} parent=1 // pred_check_branch
      %23 = sbr.rel (0) target = $region5
    $region4: #{vae_forward.1} parent=1 // pred_region
      _
    $region5: #{vae_forward.1} parent=1 // pred_fallthru
      _
    // Predicated region
    $region6: #{vae_forward.1} parent=1 // pred_check
      _
    $region7: #{vae_forward.1} parent=1 // pred_check_branch
      %25 = sbr.rel (0) target = $region9
    $region8: #{vae_forward.1} parent=1 // pred_region
      _
    $region9: #{vae_forward.1} parent=1 // pred_fallthru
      _
    // Predicated region
    $region10: #{vae_forward.1} parent=1 // pred_check
      _
    $region11: #{vae_forward.1} parent=1 // pred_check_branch
      %27 = sbr.rel (0) target = $region13
    $region12: #{vae_forward.1} parent=1 // pred_region
      _
    $region13: #{vae_forward.1} parent=1 // pred_fallthru
      _
    // Predicated region
    $region14: #{vae_forward.1} parent=1 // pred_check
      _
    $region15: #{vae_forward.1} parent=1 // pred_check_branch
      %29 = sbr.rel (0) target = $region17
    $region16: #{vae_forward.1} parent=1 // pred_region
      _
    $region17: #{vae_forward.1} parent=1 // pred_fallthru
      _
    // Predicated region
    $region18: #{vae_forward.1} parent=1 // pred_check
      _
    $region19: #{vae_forward.1} parent=1 // pred_check_branch
      %31 = sbr.rel (0) target = $region21
    $region20: #{vae_forward.1} parent=1 // pred_region
      _
    $region21: #{vae_forward.1} parent=1 // pred_fallthru
      _
    // Predicated region
    $region22: #{vae_forward.1} parent=1 // pred_check
      _
    $region23: #{vae_forward.1} parent=1 // pred_check_branch
      %33 = sbr.rel (0) target = $region25
    $region24: #{vae_forward.1} parent=1 // pred_region
      _
    $region25: #{vae_forward.1} parent=1 // pred_fallthru
      _
    // Predicated region
    $region26: #{vae_forward.1} parent=1 // pred_check
      _
    $region27: #{vae_forward.1} parent=1 // pred_check_branch
      %35 = sbr.rel (0) target = $region29
    $region28: #{vae_forward.1} parent=1 // pred_region
      _
    $region29: #{vae_forward.1} parent=1 // pred_fallthru
      _
    // Predicated region
    $region30: #{vae_forward.1} parent=1 // pred_check
      _
    $region31: #{vae_forward.1} parent=1 // pred_check_branch
      %37 = sbr.rel (0) target = $region33
    $region32: #{vae_forward.1} parent=1 // pred_region
      _
    $region33: #{vae_forward.1} parent=1 // pred_fallthru
      _
    // Predicated region
    $region34: #{vae_forward.1} parent=1 // pred_check
      _
    $region35: #{vae_forward.1} parent=1 // pred_check_branch
      %39 = sbr.rel (0) target = $region37
    $region36: #{vae_forward.1} parent=1 // pred_region
      _
    $region37: #{vae_forward.1} parent=1 // pred_fallthru
      _
    // Predicated region
    $region38: #{vae_forward.1} parent=1 // pred_check
      _
    $region39: #{vae_forward.1} parent=1 // pred_check_branch
      %41 = sbr.rel (0) target = $region41
    $region40: #{vae_forward.1} parent=1 // pred_region
      _
    $region41: #{vae_forward.1} parent=1 // pred_fallthru
      _
    // Predicated region
    $region42: #{vae_forward.1} parent=1 // pred_check
      _
    $region43: #{vae_forward.1} parent=1 // pred_check_branch
      %43 = sbr.rel (0) target = $region45
    $region44: #{vae_forward.1} parent=1 // pred_region
      _
    $region45: #{vae_forward.1} parent=1 // pred_fallthru
      _
    // Predicated region
    $region46: #{vae_forward.1} parent=1 // pred_check
      _
    $region47: #{vae_forward.1} parent=1 // pred_check_branch
      %45 = sbr.rel (0) target = $region49
    $region48: #{vae_forward.1} parent=1 // pred_region
      _
    $region49: #{vae_forward.1} parent=1 // pred_fallthru
      _
    // Predicated region
    $region50: #{vae_forward.1} parent=1 // pred_check
      _
    $region51: #{vae_forward.1} parent=1 // pred_check_branch
      %47 = sbr.rel (0) target = $region53
    $region52: #{vae_forward.1} parent=1 // pred_region
      _
    $region53: #{vae_forward.1} parent=1 // pred_fallthru
      _
    // Predicated region
    $region54: #{vae_forward.1} parent=1 // pred_check
      _
    $region55: #{vae_forward.1} parent=1 // pred_check_branch
      %49 = sbr.rel (0) target = $region57
    $region56: #{vae_forward.1} parent=1 // pred_region
      _
    $region57: #{vae_forward.1} parent=1 // pred_fallthru
      _
    %v51 = vld [vmem:[%s0] sm:$0xff]
    %v52 = vld [vmem:[%s0 + $0x8] sm:$0x3f]
    %v55 = vcombine.high %v51, %v51
    %v57 = vunpack.c.l.s4 1983009808
    %v58 = vunpack.c.0.s8 %v57
    %v59 = vlaneseq
    %v60 = vshrl.u32 %v59, 7
    %v61 = vsub.s32 %v58, %v60
    %v62 = vrot.slane %v51, %v61
    %v64 = vunpack.c.l.s4 1983009808
    %v65 = vunpack.c.0.s8 %v64
    %v66 = vlaneseq
    %v67 = vshrl.u32 %v66, 7
    %v68 = vsub.s32 %v65, %v67
    %v69 = vrot.slane %v55, %v68
    %v70 = vcombine.high %v62, %v62
    %v71 = vcombine.high %v69, %v69
    %v72 = vcombine.high %v52, %v52
    %v74 = vunpack.c.l.s4 1983009808
    %v75 = vunpack.c.0.s8 %v74
    %v76 = vlaneseq
    %v77 = vshrl.u32 %v76, 7
    %v78 = vsub.s32 %v75, %v77
    %v79 = vrot.slane %v52, %v78
    %v81 = vunpack.c.l.s4 1983009808
    %v82 = vunpack.c.0.s8 %v81
    %v83 = vlaneseq
    %v84 = vshrl.u32 %v83, 7
    %v85 = vsub.s32 %v82, %v84
    %v86 = vrot.slane %v72, %v85
    %v87 = vcombine.high %v79, %v79
    %v95 = vpack.c.bf16 %v62, %v62
    %v96 = vpack.c.bf16 %v70, %v70
    %v97 = vpack.c.bf16 %v69, %v69
    %v98 = vpack.c.bf16 %v71, %v71
    %v99 = vpack.c.bf16 %v79, %v79
    %v100 = vpack.c.bf16 %v87, %v87
    %v101 = vpack.c.bf16 %v86, %v86
    %v102 = vld [vmem:[%s2] sm:$0xff]
    %v103 = vld [vmem:[%s2 + $0x8] sm:$0xff]
    %v104 = vld [vmem:[%s2 + $0x10] sm:$0xff]
    %v105 = vld [vmem:[%s2 + $0x18] sm:$0xff]
    %v106 = vld [vmem:[%s2 + $0x20] sm:$0xff]
    %v107 = vld [vmem:[%s2 + $0x28] sm:$0xff]
    %v108 = vld [vmem:[%s2 + $0x30] sm:$0xff]
    %v109 = vld [vmem:[%s2 + $0x38] sm:$0xff]
    %v110 = vld [vmem:[%s2 + $0x40] sm:$0xff]
    %v111 = vld [vmem:[%s2 + $0x48] sm:$0xff]
    %v112 = vld [vmem:[%s2 + $0x50] sm:$0xff]
    %v113 = vld [vmem:[%s2 + $0x58] sm:$0xff]
    %v114 = vld [vmem:[%s2 + $0x60] sm:$0xff]
    %v115 = vld [vmem:[%s2 + $0x68] sm:$0xff]
    %v116 = vld [vmem:[%s2 + $0x70] sm:$0xff]
    %v117 = vld [vmem:[%s2 + $0x78] sm:$0xff]
    %v118 = vld [vmem:[%s2 + $0x80] sm:$0xff]
    %v119 = vld [vmem:[%s2 + $0x88] sm:$0xff]
    %v120 = vld [vmem:[%s2 + $0x90] sm:$0xff]
    %v121 = vld [vmem:[%s2 + $0x98] sm:$0xff]
    %v122 = vld [vmem:[%s2 + $0xa0] sm:$0xff]
    %v123 = vld [vmem:[%s2 + $0xa8] sm:$0xff]
    %v124 = vld [vmem:[%s2 + $0xb0] sm:$0xff]
    %v125 = vld [vmem:[%s2 + $0xb8] sm:$0xff]
    %v126 = vld [vmem:[%s2 + $0xc0] sm:$0xff]
    %v127 = vld [vmem:[%s2 + $0xc8] sm:$0xff]
    %v128 = vld [vmem:[%s2 + $0xd0] sm:$0xff]
    %v129 = vld [vmem:[%s2 + $0xd8] sm:$0xff]
    %v130 = vld [vmem:[%s2 + $0xe0] sm:$0xff]
    %v131 = vld [vmem:[%s2 + $0xe8] sm:$0xff]
    %v132 = vld [vmem:[%s2 + $0xf0] sm:$0xff]
    %v133 = vld [vmem:[%s2 + $0xf8] sm:$0xff]
    %v134 = vld [vmem:[%s2 + $0x100] sm:$0xff]
    %v135 = vld [vmem:[%s2 + $0x108] sm:$0xff]
    %v136 = vld [vmem:[%s2 + $0x110] sm:$0xff]
    %v137 = vld [vmem:[%s2 + $0x118] sm:$0xff]
    %v138 = vld [vmem:[%s2 + $0x120] sm:$0xff]
    %v139 = vld [vmem:[%s2 + $0x128] sm:$0xff]
    %v140 = vld [vmem:[%s2 + $0x130] sm:$0xff]
    %v141 = vld [vmem:[%s2 + $0x138] sm:$0xff]
    %v142 = vld [vmem:[%s2 + $0x140] sm:$0xff]
    %v143 = vld [vmem:[%s2 + $0x148] sm:$0xff]
    %v144 = vld [vmem:[%s2 + $0x150] sm:$0xff]
    %v145 = vld [vmem:[%s2 + $0x158] sm:$0xff]
    %v146 = vld [vmem:[%s2 + $0x160] sm:$0xff]
    %v147 = vld [vmem:[%s2 + $0x168] sm:$0xff]
    %v148 = vld [vmem:[%s2 + $0x170] sm:$0xff]
    %v149 = vld [vmem:[%s2 + $0x178] sm:$0xff]
    %v150 = vld [vmem:[%s2 + $0x180] sm:$0xff]
    %v151 = vld [vmem:[%s2 + $0x188] sm:$0xff]
    %v152 = vld [vmem:[%s2 + $0x190] sm:$0xff]
    %v153 = vld [vmem:[%s2 + $0x198] sm:$0xff]
    %v154 = vld [vmem:[%s2 + $0x1a0] sm:$0xff]
    %v155 = vld [vmem:[%s2 + $0x1a8] sm:$0xff]
    %v156 = vld [vmem:[%s2 + $0x1b0] sm:$0xff]
    %v157 = vld [vmem:[%s2 + $0x1b8] sm:$0xff]
    %v158 = vld [vmem:[%s2 + $0x1c0] sm:$0xff]
    %v159 = vld [vmem:[%s2 + $0x1c8] sm:$0xff]
    %v160 = vld [vmem:[%s2 + $0x1d0] sm:$0xff]
    %v161 = vld [vmem:[%s2 + $0x1d8] sm:$0xff]
    %v162 = vld [vmem:[%s2 + $0x1e0] sm:$0xff]
    %v163 = vld [vmem:[%s2 + $0x1e8] sm:$0xff]
    %v164 = vld [vmem:[%s2 + $0x1f0] sm:$0xff]
    %v165 = vld [vmem:[%s2 + $0x1f8] sm:$0xff]
    %v166 = vld [vmem:[%s2 + $0x200] sm:$0xff]
    %v167 = vld [vmem:[%s2 + $0x208] sm:$0xff]
    %v168 = vld [vmem:[%s2 + $0x210] sm:$0xff]
    %v169 = vld [vmem:[%s2 + $0x218] sm:$0xff]
    %v170 = vld [vmem:[%s2 + $0x220] sm:$0xff]
    %v171 = vld [vmem:[%s2 + $0x228] sm:$0xff]
    %v172 = vld [vmem:[%s2 + $0x230] sm:$0xff]
    %v173 = vld [vmem:[%s2 + $0x238] sm:$0xff]
    %v174 = vld [vmem:[%s2 + $0x240] sm:$0xff]
    %v175 = vld [vmem:[%s2 + $0x248] sm:$0xff]
    %v176 = vld [vmem:[%s2 + $0x250] sm:$0xff]
    %v177 = vld [vmem:[%s2 + $0x258] sm:$0xff]
    %v178 = vld [vmem:[%s2 + $0x260] sm:$0xff]
    %v179 = vld [vmem:[%s2 + $0x268] sm:$0xff]
    %v180 = vld [vmem:[%s2 + $0x270] sm:$0xff]
    %v181 = vld [vmem:[%s2 + $0x278] sm:$0xff]
    %v182 = vld [vmem:[%s2 + $0x280] sm:$0xff]
    %v183 = vld [vmem:[%s2 + $0x288] sm:$0xff]
    %v184 = vld [vmem:[%s2 + $0x290] sm:$0xff]
    %v185 = vld [vmem:[%s2 + $0x298] sm:$0xff]
    %v186 = vld [vmem:[%s2 + $0x2a0] sm:$0xff]
    %v187 = vld [vmem:[%s2 + $0x2a8] sm:$0xff]
    %v188 = vld [vmem:[%s2 + $0x2b0] sm:$0xff]
    %v189 = vld [vmem:[%s2 + $0x2b8] sm:$0xff]
    %v190 = vld [vmem:[%s2 + $0x2c0] sm:$0xff]
    %v191 = vld [vmem:[%s2 + $0x2c8] sm:$0xff]
    %v192 = vld [vmem:[%s2 + $0x2d0] sm:$0xff]
    %v193 = vld [vmem:[%s2 + $0x2d8] sm:$0xff]
    %v194 = vld [vmem:[%s2 + $0x2e0] sm:$0xff]
    %v195 = vld [vmem:[%s2 + $0x2e8] sm:$0xff]
    %v196 = vld [vmem:[%s2 + $0x2f0] sm:$0xff]
    %v197 = vld [vmem:[%s2 + $0x2f8] sm:$0xff]
    %v198 = vld [vmem:[%s2 + $0x300] sm:$0xff]
    %v199 = vld [vmem:[%s2 + $0x308] sm:$0xff]
    %v200 = vld [vmem:[%s3] sm:$0x3]
    %v202 = vlaneseq
    %v203 = vshrl.u32 %v202, 7
    %v204 = vsub.s32 0, %v203
    %v205 = vrot.slane %v200, %v204
    %v206 = vlaneseq
    %v207 = vshrl.u32 %v206, 7
    %v208 = vsub.s32 1, %v207
    %v209 = vrot.slane %v200, %v208
    %v310 = vunpack.c.l.b16 %v102
    %v311 = vunpack.c.h.b16 %v102
    %v312 = vunpack.c.l.b16 %v103
    %v313 = vunpack.c.h.b16 %v103
    %v314 = vunpack.c.l.b16 %v104
    %v315 = vunpack.c.h.b16 %v104
    %v316 = vunpack.c.l.b16 %v105
    %v317 = vunpack.c.h.b16 %v105
    %v318 = vunpack.c.l.b16 %v106
    %v319 = vunpack.c.h.b16 %v106
    %v320 = vunpack.c.l.b16 %v107
    %v321 = vunpack.c.h.b16 %v107
    %v322 = vunpack.c.l.b16 %v108
    %v323 = vunpack.c.h.b16 %v108
    %v324 = vunpack.c.l.b16 %v109
    %v325 = vunpack.c.h.b16 %v109
    %v326 = vunpack.c.l.b16 %v110
    %v327 = vunpack.c.h.b16 %v110
    %v328 = vunpack.c.l.b16 %v111
    %v329 = vunpack.c.h.b16 %v111
    %v330 = vunpack.c.l.b16 %v112
    %v331 = vunpack.c.h.b16 %v112
    %v332 = vunpack.c.l.b16 %v113
    %v333 = vunpack.c.h.b16 %v113
    %v334 = vunpack.c.l.b16 %v114
    %v335 = vunpack.c.h.b16 %v114
    %v336 = vunpack.c.l.b16 %v115
    %v337 = vunpack.c.h.b16 %v115
    %v338 = vunpack.c.l.b16 %v116
    %v339 = vunpack.c.h.b16 %v116
    %v340 = vunpack.c.l.b16 %v117
    %v341 = vunpack.c.h.b16 %v117
    %v342 = vunpack.c.l.b16 %v118
    %v343 = vunpack.c.h.b16 %v118
    %v344 = vunpack.c.l.b16 %v119
    %v345 = vunpack.c.h.b16 %v119
    %v346 = vunpack.c.l.b16 %v120
    %v347 = vunpack.c.h.b16 %v120
    %v348 = vunpack.c.l.b16 %v121
    %v349 = vunpack.c.h.b16 %v121
    %v350 = vunpack.c.l.b16 %v122
    %v351 = vunpack.c.h.b16 %v122
    %v352 = vunpack.c.l.b16 %v123
    %v353 = vunpack.c.h.b16 %v123
    %v354 = vunpack.c.l.b16 %v124
    %v355 = vunpack.c.h.b16 %v124
    %v356 = vunpack.c.l.b16 %v125
    %v357 = vunpack.c.h.b16 %v125
    %v358 = vunpack.c.l.b16 %v126
    %v359 = vunpack.c.h.b16 %v126
    %v360 = vunpack.c.l.b16 %v127
    %v361 = vunpack.c.h.b16 %v127
    %v362 = vunpack.c.l.b16 %v128
    %v363 = vunpack.c.h.b16 %v128
    %v364 = vunpack.c.l.b16 %v129
    %v365 = vunpack.c.h.b16 %v129
    %v366 = vunpack.c.l.b16 %v130
    %v367 = vunpack.c.h.b16 %v130
    %v368 = vunpack.c.l.b16 %v131
    %v369 = vunpack.c.h.b16 %v131
    %v370 = vunpack.c.l.b16 %v132
    %v371 = vunpack.c.h.b16 %v132
    %v372 = vunpack.c.l.b16 %v133
    %v373 = vunpack.c.h.b16 %v133
    %v374 = vunpack.c.l.b16 %v134
    %v375 = vunpack.c.h.b16 %v134
    %v376 = vunpack.c.l.b16 %v135
    %v377 = vunpack.c.h.b16 %v135
    %v378 = vunpack.c.l.b16 %v136
    %v379 = vunpack.c.h.b16 %v136
    %v380 = vunpack.c.l.b16 %v137
    %v381 = vunpack.c.h.b16 %v137
    %v382 = vunpack.c.l.b16 %v138
    %v383 = vunpack.c.h.b16 %v138
    %v384 = vunpack.c.l.b16 %v139
    %v385 = vunpack.c.h.b16 %v139
    %v386 = vunpack.c.l.b16 %v140
    %v387 = vunpack.c.h.b16 %v140
    %v388 = vunpack.c.l.b16 %v141
    %v389 = vunpack.c.h.b16 %v141
    %v390 = vunpack.c.l.b16 %v142
    %v391 = vunpack.c.h.b16 %v142
    %v392 = vunpack.c.l.b16 %v143
    %v393 = vunpack.c.h.b16 %v143
    %v394 = vunpack.c.l.b16 %v144
    %v395 = vunpack.c.h.b16 %v144
    %v396 = vunpack.c.l.b16 %v145
    %v397 = vunpack.c.h.b16 %v145
    %v398 = vunpack.c.l.b16 %v146
    %v399 = vunpack.c.h.b16 %v146
    %v400 = vunpack.c.l.b16 %v147
    %v401 = vunpack.c.h.b16 %v147
    %v402 = vunpack.c.l.b16 %v148
    %v403 = vunpack.c.h.b16 %v148
    %v404 = vunpack.c.l.b16 %v149
    %v405 = vunpack.c.h.b16 %v149
    %v406 = vunpack.c.l.b16 %v150
    %v407 = vunpack.c.h.b16 %v150
    %v408 = vunpack.c.l.b16 %v151
    %v409 = vunpack.c.h.b16 %v151
    %v410 = vunpack.c.l.b16 %v152
    %v411 = vunpack.c.h.b16 %v152
    %v412 = vunpack.c.l.b16 %v153
    %v413 = vunpack.c.h.b16 %v153
    %v414 = vunpack.c.l.b16 %v154
    %v415 = vunpack.c.h.b16 %v154
    %v416 = vunpack.c.l.b16 %v155
    %v417 = vunpack.c.h.b16 %v155
    %v418 = vunpack.c.l.b16 %v156
    %v419 = vunpack.c.h.b16 %v156
    %v420 = vunpack.c.l.b16 %v157
    %v421 = vunpack.c.h.b16 %v157
    %v422 = vunpack.c.l.b16 %v158
    %v423 = vunpack.c.h.b16 %v158
    %v424 = vunpack.c.l.b16 %v159
    %v425 = vunpack.c.h.b16 %v159
    %v426 = vunpack.c.l.b16 %v160
    %v427 = vunpack.c.h.b16 %v160
    %v428 = vunpack.c.l.b16 %v161
    %v429 = vunpack.c.h.b16 %v161
    %v430 = vunpack.c.l.b16 %v162
    %v431 = vunpack.c.h.b16 %v162
    %v432 = vunpack.c.l.b16 %v163
    %v433 = vunpack.c.h.b16 %v163
    %v434 = vunpack.c.l.b16 %v164
    %v435 = vunpack.c.h.b16 %v164
    %v436 = vunpack.c.l.b16 %v165
    %v437 = vunpack.c.h.b16 %v165
    %v438 = vunpack.c.l.b16 %v166
    %v439 = vunpack.c.h.b16 %v166
    %v440 = vunpack.c.l.b16 %v167
    %v441 = vunpack.c.h.b16 %v167
    %v442 = vunpack.c.l.b16 %v168
    %v443 = vunpack.c.h.b16 %v168
    %v444 = vunpack.c.l.b16 %v169
    %v445 = vunpack.c.h.b16 %v169
    %v446 = vunpack.c.l.b16 %v170
    %v447 = vunpack.c.h.b16 %v170
    %v448 = vunpack.c.l.b16 %v171
    %v449 = vunpack.c.h.b16 %v171
    %v450 = vunpack.c.l.b16 %v172
    %v451 = vunpack.c.h.b16 %v172
    %v452 = vunpack.c.l.b16 %v173
    %v453 = vunpack.c.h.b16 %v173
    %v454 = vunpack.c.l.b16 %v174
    %v455 = vunpack.c.h.b16 %v174
    %v456 = vunpack.c.l.b16 %v175
    %v457 = vunpack.c.h.b16 %v175
    %v458 = vunpack.c.l.b16 %v176
    %v459 = vunpack.c.h.b16 %v176
    %v460 = vunpack.c.l.b16 %v177
    %v461 = vunpack.c.h.b16 %v177
    %v462 = vunpack.c.l.b16 %v178
    %v463 = vunpack.c.h.b16 %v178
    %v464 = vunpack.c.l.b16 %v179
    %v465 = vunpack.c.h.b16 %v179
    %v466 = vunpack.c.l.b16 %v180
    %v467 = vunpack.c.h.b16 %v180
    %v468 = vunpack.c.l.b16 %v181
    %v469 = vunpack.c.h.b16 %v181
    %v470 = vunpack.c.l.b16 %v182
    %v471 = vunpack.c.h.b16 %v182
    %v472 = vunpack.c.l.b16 %v183
    %v473 = vunpack.c.h.b16 %v183
    %v474 = vunpack.c.l.b16 %v184
    %v475 = vunpack.c.h.b16 %v184
    %v476 = vunpack.c.l.b16 %v185
    %v477 = vunpack.c.h.b16 %v185
    %v478 = vunpack.c.l.b16 %v186
    %v479 = vunpack.c.h.b16 %v186
    %v480 = vunpack.c.l.b16 %v187
    %v481 = vunpack.c.h.b16 %v187
    %v482 = vunpack.c.l.b16 %v188
    %v483 = vunpack.c.h.b16 %v188
    %v484 = vunpack.c.l.b16 %v189
    %v485 = vunpack.c.h.b16 %v189
    %v486 = vunpack.c.l.b16 %v190
    %v487 = vunpack.c.h.b16 %v190
    %v488 = vunpack.c.l.b16 %v191
    %v489 = vunpack.c.h.b16 %v191
    %v490 = vunpack.c.l.b16 %v192
    %v491 = vunpack.c.h.b16 %v192
    %v492 = vunpack.c.l.b16 %v193
    %v493 = vunpack.c.h.b16 %v193
    %v494 = vunpack.c.l.b16 %v194
    %v495 = vunpack.c.h.b16 %v194
    %v496 = vunpack.c.l.b16 %v195
    %v497 = vunpack.c.h.b16 %v195
    %v498 = vunpack.c.l.b16 %v196
    %v499 = vunpack.c.h.b16 %v196
    %v500 = vunpack.c.l.b16 %v197
    %v501 = vunpack.c.h.b16 %v197
    %v502 = vunpack.c.l.b16 %v198
    %v503 = vunpack.c.h.b16 %v198
    %v504 = vunpack.c.l.b16 %v199
    %v505 = vunpack.c.h.b16 %v199
    %v506 = vpack.c.b16 %v312, %v310
    %v507 = vpack.c.b16 %v313, %v311
    %v508 = vpack.c.b16 %v316, %v314
    %v509 = vpack.c.b16 %v317, %v315
    %v510 = vpack.c.b16 %v320, %v318
    %v511 = vpack.c.b16 %v321, %v319
    %v512 = vpack.c.b16 %v324, %v322
    %v513 = vpack.c.b16 %v325, %v323
    %v514 = vpack.c.b16 %v328, %v326
    %v515 = vpack.c.b16 %v329, %v327
    %v516 = vpack.c.b16 %v332, %v330
    %v517 = vpack.c.b16 %v333, %v331
    %v518 = vpack.c.b16 %v336, %v334
    %v519 = vpack.c.b16 %v337, %v335
    %v520 = vpack.c.b16 %v340, %v338
    %v521 = vpack.c.b16 %v341, %v339
    %v522 = vpack.c.b16 %v344, %v342
    %v523 = vpack.c.b16 %v345, %v343
    %v524 = vpack.c.b16 %v348, %v346
    %v525 = vpack.c.b16 %v349, %v347
    %v526 = vpack.c.b16 %v352, %v350
    %v527 = vpack.c.b16 %v353, %v351
    %v528 = vpack.c.b16 %v356, %v354
    %v529 = vpack.c.b16 %v357, %v355
    %v530 = vpack.c.b16 %v360, %v358
    %v531 = vpack.c.b16 %v361, %v359
    %v532 = vpack.c.b16 %v364, %v362
    %v533 = vpack.c.b16 %v365, %v363
    %v534 = vpack.c.b16 %v368, %v366
    %v535 = vpack.c.b16 %v369, %v367
    %v536 = vpack.c.b16 %v372, %v370
    %v537 = vpack.c.b16 %v373, %v371
    %v538 = vpack.c.b16 %v376, %v374
    %v539 = vpack.c.b16 %v377, %v375
    %v540 = vpack.c.b16 %v380, %v378
    %v541 = vpack.c.b16 %v381, %v379
    %v542 = vpack.c.b16 %v384, %v382
    %v543 = vpack.c.b16 %v385, %v383
    %v544 = vpack.c.b16 %v388, %v386
    %v545 = vpack.c.b16 %v389, %v387
    %v546 = vpack.c.b16 %v392, %v390
    %v547 = vpack.c.b16 %v393, %v391
    %v548 = vpack.c.b16 %v396, %v394
    %v549 = vpack.c.b16 %v397, %v395
    %v550 = vpack.c.b16 %v400, %v398
    %v551 = vpack.c.b16 %v401, %v399
    %v552 = vpack.c.b16 %v404, %v402
    %v553 = vpack.c.b16 %v405, %v403
    %v554 = vpack.c.b16 %v408, %v406
    %v555 = vpack.c.b16 %v409, %v407
    %v556 = vpack.c.b16 %v412, %v410
    %v557 = vpack.c.b16 %v413, %v411
    %v558 = vpack.c.b16 %v416, %v414
    %v559 = vpack.c.b16 %v417, %v415
    %v560 = vpack.c.b16 %v420, %v418
    %v561 = vpack.c.b16 %v421, %v419
    %v562 = vpack.c.b16 %v424, %v422
    %v563 = vpack.c.b16 %v425, %v423
    %v564 = vpack.c.b16 %v428, %v426
    %v565 = vpack.c.b16 %v429, %v427
    %v566 = vpack.c.b16 %v432, %v430
    %v567 = vpack.c.b16 %v433, %v431
    %v568 = vpack.c.b16 %v436, %v434
    %v569 = vpack.c.b16 %v437, %v435
    %v570 = vpack.c.b16 %v440, %v438
    %v571 = vpack.c.b16 %v441, %v439
    %v572 = vpack.c.b16 %v444, %v442
    %v573 = vpack.c.b16 %v445, %v443
    %v574 = vpack.c.b16 %v448, %v446
    %v575 = vpack.c.b16 %v449, %v447
    %v576 = vpack.c.b16 %v452, %v450
    %v577 = vpack.c.b16 %v453, %v451
    %v578 = vpack.c.b16 %v456, %v454
    %v579 = vpack.c.b16 %v457, %v455
    %v580 = vpack.c.b16 %v460, %v458
    %v581 = vpack.c.b16 %v461, %v459
    %v582 = vpack.c.b16 %v464, %v462
    %v583 = vpack.c.b16 %v465, %v463
    %v584 = vpack.c.b16 %v468, %v466
    %v585 = vpack.c.b16 %v469, %v467
    %v586 = vpack.c.b16 %v472, %v470
    %v587 = vpack.c.b16 %v473, %v471
    %v588 = vpack.c.b16 %v476, %v474
    %v589 = vpack.c.b16 %v477, %v475
    %v590 = vpack.c.b16 %v480, %v478
    %v591 = vpack.c.b16 %v481, %v479
    %v592 = vpack.c.b16 %v484, %v482
    %v593 = vpack.c.b16 %v485, %v483
    %v594 = vpack.c.b16 %v488, %v486
    %v595 = vpack.c.b16 %v489, %v487
    %v596 = vpack.c.b16 %v492, %v490
    %v597 = vpack.c.b16 %v493, %v491
    %v598 = vpack.c.b16 %v496, %v494
    %v599 = vpack.c.b16 %v497, %v495
    %v600 = vpack.c.b16 %v500, %v498
    %v601 = vpack.c.b16 %v501, %v499
    %v602 = vpack.c.b16 %v504, %v502
    %v603 = vpack.c.b16 %v505, %v503
    %vm702 = vcmask 130048
    %v704 = vsel %vm702, %v101, 0
    %706 = vmatprep.subr.bf16.mxu0 %v507
    %707 = vmatpush1.bf16.msra.mxu0 %v506
    %708 = vmatprep.subr.bf16.mxu0 %v509
    %709 = vmatpush1.bf16.msra.mxu0 %v508
    %710 = vmatprep.subr.bf16.mxu0 %v511
    %711 = vmatpush1.bf16.msra.mxu0 %v510
    %712 = vmatprep.subr.bf16.mxu0 %v513
    %713 = vmatpush1.bf16.msra.mxu0 %v512
    %714 = vmatprep.subr.bf16.mxu0 %v515
    %715 = vmatpush1.bf16.msra.mxu0 %v514
    %716 = vmatprep.subr.bf16.mxu0 %v517
    %717 = vmatpush1.bf16.msra.mxu0 %v516
    %718 = vmatprep.subr.bf16.mxu0 %v519
    %719 = vmatpush1.bf16.msra.mxu0 %v518
    %720 = vmatprep.subr.bf16.mxu0 %v521
    %721 = vmatpush1.bf16.msra.mxu0 %v520
    %722 = vmatprep.subr.bf16.mxu0 %v523
    %723 = vmatpush1.bf16.msra.mxu0 %v522
    %724 = vmatprep.subr.bf16.mxu0 %v525
    %725 = vmatpush1.bf16.msra.mxu0 %v524
    %726 = vmatprep.subr.bf16.mxu0 %v527
    %727 = vmatpush1.bf16.msra.mxu0 %v526
    %728 = vmatprep.subr.bf16.mxu0 %v529
    %729 = vmatpush1.bf16.msra.mxu0 %v528
    %730 = vmatprep.subr.bf16.mxu0 %v531
    %731 = vmatpush1.bf16.msra.mxu0 %v530
    %732 = vmatprep.subr.bf16.mxu0 %v533
    %733 = vmatpush1.bf16.msra.mxu0 %v532
    %734 = vmatprep.subr.bf16.mxu0 %v535
    %735 = vmatpush1.bf16.msra.mxu0 %v534
    %736 = vmatprep.subr.bf16.mxu0 %v537
    %737 = vmatpush1.bf16.msra.mxu0 %v536
    %738 = vmatprep.mubr.bf16.mxu0 %v96
    %739 = vmatmul.mubr.bf16.gmra.mrb[0].mxu0 %v95
    %v740 = vpop.f32.mrb[0].mxu0
    %v741 = vadd.f32 %v205, %v740
    %v742 = vpop.f32.mrb[0].mxu0
    %v743 = vadd.f32 %v209, %v742
    %v744 = vpop.f32.mrb[0].mxu0
    %v745 = vpop.f32.mrb[0].mxu0
    %746 = vdwg.mxu0
    %747 = vmatprep.subr.bf16.mxu0 %v539
    %748 = vmatpush1.bf16.msra.mxu0 %v538
    %749 = vmatprep.subr.bf16.mxu0 %v541
    %750 = vmatpush1.bf16.msra.mxu0 %v540
    %751 = vmatprep.subr.bf16.mxu0 %v543
    %752 = vmatpush1.bf16.msra.mxu0 %v542
    %753 = vmatprep.subr.bf16.mxu0 %v545
    %754 = vmatpush1.bf16.msra.mxu0 %v544
    %755 = vmatprep.subr.bf16.mxu0 %v547
    %756 = vmatpush1.bf16.msra.mxu0 %v546
    %757 = vmatprep.subr.bf16.mxu0 %v549
    %758 = vmatpush1.bf16.msra.mxu0 %v548
    %759 = vmatprep.subr.bf16.mxu0 %v551
    %760 = vmatpush1.bf16.msra.mxu0 %v550
    %761 = vmatprep.subr.bf16.mxu0 %v553
    %762 = vmatpush1.bf16.msra.mxu0 %v552
    %763 = vmatprep.subr.bf16.mxu0 %v555
    %764 = vmatpush1.bf16.msra.mxu0 %v554
    %765 = vmatprep.subr.bf16.mxu0 %v557
    %766 = vmatpush1.bf16.msra.mxu0 %v556
    %767 = vmatprep.subr.bf16.mxu0 %v559
    %768 = vmatpush1.bf16.msra.mxu0 %v558
    %769 = vmatprep.subr.bf16.mxu0 %v561
    %770 = vmatpush1.bf16.msra.mxu0 %v560
    %771 = vmatprep.subr.bf16.mxu0 %v563
    %772 = vmatpush1.bf16.msra.mxu0 %v562
    %773 = vmatprep.subr.bf16.mxu0 %v565
    %774 = vmatpush1.bf16.msra.mxu0 %v564
    %775 = vmatprep.subr.bf16.mxu0 %v567
    %776 = vmatpush1.bf16.msra.mxu0 %v566
    %777 = vmatprep.subr.bf16.mxu0 %v569
    %778 = vmatpush1.bf16.msra.mxu0 %v568
    %779 = vmatprep.mubr.bf16.mxu0 %v98
    %780 = vmatmul.mubr.bf16.gmra.mrb[0].mxu0 %v97
    %v781 = vpop.f32.mrb[0].mxu0
    %v782 = vadd.f32 %v741, %v781
    %v783 = vpop.f32.mrb[0].mxu0
    %v784 = vadd.f32 %v743, %v783
    %v785 = vpop.f32.mrb[0].mxu0
    %v786 = vpop.f32.mrb[0].mxu0
    %787 = vdwg.mxu0
    %788 = vmatprep.subr.bf16.mxu0 %v571
    %789 = vmatpush1.bf16.msra.mxu0 %v570
    %790 = vmatprep.subr.bf16.mxu0 %v573
    %791 = vmatpush1.bf16.msra.mxu0 %v572
    %792 = vmatprep.subr.bf16.mxu0 %v575
    %793 = vmatpush1.bf16.msra.mxu0 %v574
    %794 = vmatprep.subr.bf16.mxu0 %v577
    %795 = vmatpush1.bf16.msra.mxu0 %v576
    %796 = vmatprep.subr.bf16.mxu0 %v579
    %797 = vmatpush1.bf16.msra.mxu0 %v578
    %798 = vmatprep.subr.bf16.mxu0 %v581
    %799 = vmatpush1.bf16.msra.mxu0 %v580
    %800 = vmatprep.subr.bf16.mxu0 %v583
    %801 = vmatpush1.bf16.msra.mxu0 %v582
    %802 = vmatprep.subr.bf16.mxu0 %v585
    %803 = vmatpush1.bf16.msra.mxu0 %v584
    %804 = vmatprep.subr.bf16.mxu0 %v587
    %805 = vmatpush1.bf16.msra.mxu0 %v586
    %806 = vmatprep.subr.bf16.mxu0 %v589
    %807 = vmatpush1.bf16.msra.mxu0 %v588
    %808 = vmatprep.subr.bf16.mxu0 %v591
    %809 = vmatpush1.bf16.msra.mxu0 %v590
    %810 = vmatprep.subr.bf16.mxu0 %v593
    %811 = vmatpush1.bf16.msra.mxu0 %v592
    %812 = vmatprep.subr.bf16.mxu0 %v595
    %813 = vmatpush1.bf16.msra.mxu0 %v594
    %814 = vmatprep.subr.bf16.mxu0 %v597
    %815 = vmatpush1.bf16.msra.mxu0 %v596
    %816 = vmatprep.subr.bf16.mxu0 %v599
    %817 = vmatpush1.bf16.msra.mxu0 %v598
    %818 = vmatprep.subr.bf16.mxu0 %v601
    %819 = vmatpush1.bf16.msra.mxu0 %v600
    %820 = vmatprep.mubr.bf16.mxu0 %v100
    %821 = vmatmul.mubr.bf16.gmra.mrb[0].mxu0 %v99
    %v822 = vpop.f32.mrb[0].mxu0
    %v823 = vadd.f32 %v782, %v822
    %v824 = vpop.f32.mrb[0].mxu0
    %v825 = vadd.f32 %v784, %v824
    %v826 = vpop.f32.mrb[0].mxu0
    %v827 = vpop.f32.mrb[0].mxu0
    %828 = vdwg.mxu0
    %829 = vmatprep.subr.bf16.mxu0 %v603
    %830 = vmatpush1.bf16.msra.mxu0 %v602
    %831 = vmatprep.subr.bf16.mxu0 0
    %832 = vmatpush1.bf16.msra.mxu0 0
    %833 = vmatprep.subr.bf16.mxu0 0
    %834 = vmatpush1.bf16.msra.mxu0 0
    %835 = vmatprep.subr.bf16.mxu0 0
    %836 = vmatpush1.bf16.msra.mxu0 0
    %837 = vmatprep.subr.bf16.mxu0 0
    %838 = vmatpush1.bf16.msra.mxu0 0
    %839 = vmatprep.subr.bf16.mxu0 0
    %840 = vmatpush1.bf16.msra.mxu0 0
    %841 = vmatprep.subr.bf16.mxu0 0
    %842 = vmatpush1.bf16.msra.mxu0 0
    %843 = vmatprep.subr.bf16.mxu0 0
    %844 = vmatpush1.bf16.msra.mxu0 0
    %845 = vmatprep.subr.bf16.mxu0 0
    %846 = vmatpush1.bf16.msra.mxu0 0
    %847 = vmatprep.subr.bf16.mxu0 0
    %848 = vmatpush1.bf16.msra.mxu0 0
    %849 = vmatprep.subr.bf16.mxu0 0
    %850 = vmatpush1.bf16.msra.mxu0 0
    %851 = vmatprep.subr.bf16.mxu0 0
    %852 = vmatpush1.bf16.msra.mxu0 0
    %853 = vmatprep.subr.bf16.mxu0 0
    %854 = vmatpush1.bf16.msra.mxu0 0
    %855 = vmatprep.subr.bf16.mxu0 0
    %856 = vmatpush1.bf16.msra.mxu0 0
    %857 = vmatprep.subr.bf16.mxu0 0
    %858 = vmatpush1.bf16.msra.mxu0 0
    %859 = vmatprep.subr.bf16.mxu0 0
    %860 = vmatpush1.bf16.msra.mxu0 0
    %861 = vmatprep.mubr.bf16.mxu0 0
    %862 = vmatmul.mubr.bf16.gmra.mrb[0].mxu0 %v704
    %v863 = vpop.f32.mrb[0].mxu0
    %v864 = vadd.f32 %v823, %v863
    %v865 = vpop.f32.mrb[0].mxu0
    %v866 = vadd.f32 %v825, %v865
    %v867 = vpop.f32.mrb[0].mxu0
    %v868 = vpop.f32.mrb[0].mxu0
    %869 = vdwg.mxu0
    %v870 = vmax.f32 %v864, 0.0
    %v871 = vmax.f32 %v866, 0.0
    %v872 = vpack.c.bf16 %v870, %v870
    %v873 = vpack.c.bf16 %v871, %v871
    %v874 = vld [vmem:[%s4] sm:$0xf]
    %v875 = vld [vmem:[%s4 + $0x4] sm:$0xf]
    %v876 = vld [vmem:[%s4 + $0x8] sm:$0xf]
    %v877 = vld [vmem:[%s4 + $0xc] sm:$0xf]
    %v878 = vld [vmem:[%s4 + $0x10] sm:$0xf]
    %v879 = vld [vmem:[%s4 + $0x14] sm:$0xf]
    %v880 = vld [vmem:[%s4 + $0x18] sm:$0xf]
    %v881 = vld [vmem:[%s4 + $0x1c] sm:$0xf]
    %v882 = vld [vmem:[%s4 + $0x20] sm:$0xf]
    %v883 = vld [vmem:[%s4 + $0x24] sm:$0xf]
    %v884 = vld [vmem:[%s4 + $0x28] sm:$0xf]
    %v885 = vld [vmem:[%s4 + $0x2c] sm:$0xf]
    %v886 = vld [vmem:[%s4 + $0x30] sm:$0xf]
    %v887 = vld [vmem:[%s4 + $0x34] sm:$0xf]
    %v888 = vld [vmem:[%s4 + $0x38] sm:$0xf]
    %v889 = vld [vmem:[%s4 + $0x3c] sm:$0xf]
    %v890 = vld [vmem:[%s4 + $0x40] sm:$0xf]
    %v891 = vld [vmem:[%s4 + $0x44] sm:$0xf]
    %v892 = vld [vmem:[%s4 + $0x48] sm:$0xf]
    %v893 = vld [vmem:[%s4 + $0x4c] sm:$0xf]
    %v894 = vld [vmem:[%s4 + $0x50] sm:$0xf]
    %v895 = vld [vmem:[%s4 + $0x54] sm:$0xf]
    %v896 = vld [vmem:[%s4 + $0x58] sm:$0xf]
    %v897 = vld [vmem:[%s4 + $0x5c] sm:$0xf]
    %v898 = vld [vmem:[%s4 + $0x60] sm:$0xf]
    %v899 = vld [vmem:[%s4 + $0x64] sm:$0xf]
    %v900 = vld [vmem:[%s4 + $0x68] sm:$0xf]
    %v901 = vld [vmem:[%s4 + $0x6c] sm:$0xf]
    %v902 = vld [vmem:[%s4 + $0x70] sm:$0xf]
    %v903 = vld [vmem:[%s4 + $0x74] sm:$0xf]
    %v904 = vld [vmem:[%s4 + $0x78] sm:$0xf]
    %v905 = vld [vmem:[%s4 + $0x7c] sm:$0xf]
    %v906 = vld [vmem:[%s5] sm:$0x1]
    %v908 = vlaneseq
    %v909 = vshrl.u32 %v908, 7
    %v910 = vsub.s32 0, %v909
    %v911 = vrot.slane %v906, %v910
    %v945 = vunpack.c.l.b16 %v874
    %v946 = vunpack.c.l.b16 %v875
    %v947 = vunpack.c.l.b16 %v876
    %v948 = vunpack.c.l.b16 %v877
    %v949 = vunpack.c.l.b16 %v878
    %v950 = vunpack.c.l.b16 %v879
    %v951 = vunpack.c.l.b16 %v880
    %v952 = vunpack.c.l.b16 %v881
    %v953 = vunpack.c.l.b16 %v882
    %v954 = vunpack.c.l.b16 %v883
    %v955 = vunpack.c.l.b16 %v884
    %v956 = vunpack.c.l.b16 %v885
    %v957 = vunpack.c.l.b16 %v886
    %v958 = vunpack.c.l.b16 %v887
    %v959 = vunpack.c.l.b16 %v888
    %v960 = vunpack.c.l.b16 %v889
    %v961 = vunpack.c.l.b16 %v890
    %v962 = vunpack.c.l.b16 %v891
    %v963 = vunpack.c.l.b16 %v892
    %v964 = vunpack.c.l.b16 %v893
    %v965 = vunpack.c.l.b16 %v894
    %v966 = vunpack.c.l.b16 %v895
    %v967 = vunpack.c.l.b16 %v896
    %v968 = vunpack.c.l.b16 %v897
    %v969 = vunpack.c.l.b16 %v898
    %v970 = vunpack.c.l.b16 %v899
    %v971 = vunpack.c.l.b16 %v900
    %v972 = vunpack.c.l.b16 %v901
    %v973 = vunpack.c.l.b16 %v902
    %v974 = vunpack.c.l.b16 %v903
    %v975 = vunpack.c.l.b16 %v904
    %v976 = vunpack.c.l.b16 %v905
    %v977 = vpack.c.b16 %v946, %v945
    %v978 = vpack.c.b16 %v948, %v947
    %v979 = vpack.c.b16 %v950, %v949
    %v980 = vpack.c.b16 %v952, %v951
    %v981 = vpack.c.b16 %v954, %v953
    %v982 = vpack.c.b16 %v956, %v955
    %v983 = vpack.c.b16 %v958, %v957
    %v984 = vpack.c.b16 %v960, %v959
    %v985 = vpack.c.b16 %v962, %v961
    %v986 = vpack.c.b16 %v964, %v963
    %v987 = vpack.c.b16 %v966, %v965
    %v988 = vpack.c.b16 %v968, %v967
    %v989 = vpack.c.b16 %v970, %v969
    %v990 = vpack.c.b16 %v972, %v971
    %v991 = vpack.c.b16 %v974, %v973
    %v992 = vpack.c.b16 %v976, %v975
    %1009 = vmatprep.subr.bf16.mxu0 0
    %1010 = vmatpush1.bf16.msra.mxu0 %v977
    %1011 = vmatprep.subr.bf16.mxu0 0
    %1012 = vmatpush1.bf16.msra.mxu0 %v978
    %1013 = vmatprep.subr.bf16.mxu0 0
    %1014 = vmatpush1.bf16.msra.mxu0 %v979
    %1015 = vmatprep.subr.bf16.mxu0 0
    %1016 = vmatpush1.bf16.msra.mxu0 %v980
    %1017 = vmatprep.subr.bf16.mxu0 0
    %1018 = vmatpush1.bf16.msra.mxu0 %v981
    %1019 = vmatprep.subr.bf16.mxu0 0
    %1020 = vmatpush1.bf16.msra.mxu0 %v982
    %1021 = vmatprep.subr.bf16.mxu0 0
    %1022 = vmatpush1.bf16.msra.mxu0 %v983
    %1023 = vmatprep.subr.bf16.mxu0 0
    %1024 = vmatpush1.bf16.msra.mxu0 %v984
    %1025 = vmatprep.subr.bf16.mxu0 0
    %1026 = vmatpush1.bf16.msra.mxu0 %v985
    %1027 = vmatprep.subr.bf16.mxu0 0
    %1028 = vmatpush1.bf16.msra.mxu0 %v986
    %1029 = vmatprep.subr.bf16.mxu0 0
    %1030 = vmatpush1.bf16.msra.mxu0 %v987
    %1031 = vmatprep.subr.bf16.mxu0 0
    %1032 = vmatpush1.bf16.msra.mxu0 %v988
    %1033 = vmatprep.subr.bf16.mxu0 0
    %1034 = vmatpush1.bf16.msra.mxu0 %v989
    %1035 = vmatprep.subr.bf16.mxu0 0
    %1036 = vmatpush1.bf16.msra.mxu0 %v990
    %1037 = vmatprep.subr.bf16.mxu0 0
    %1038 = vmatpush1.bf16.msra.mxu0 %v991
    %1039 = vmatprep.subr.bf16.mxu0 0
    %1040 = vmatpush1.bf16.msra.mxu0 %v992
    %1041 = vmatprep.mubr.bf16.mxu0 %v873
    %1042 = vmatmul.mubr.bf16.gmra.mrb[0].mxu0 %v872
    %v1043 = vpop.f32.mrb[0].mxu0
    %v1044 = vadd.f32 %v911, %v1043
    %v1045 = vpop.f32.mrb[0].mxu0
    %v1046 = vpop.f32.mrb[0].mxu0
    %v1047 = vpop.f32.mrb[0].mxu0
    %1048 = vdwg.mxu0
    %v1049 = vmax.f32 %v1044, 0.0
    %v1050 = vld [vmem:[%s6] sm:$0xff]
    %v1051 = vld [vmem:[%s6 + $0x8] sm:$0xff]
    %v1052 = vld [vmem:[%s6 + $0x10] sm:$0xff]
    %v1053 = vld [vmem:[%s6 + $0x18] sm:$0xff]
    %v1054 = vld [vmem:[%s6 + $0x20] sm:$0xff]
    %v1055 = vld [vmem:[%s6 + $0x28] sm:$0xff]
    %v1056 = vld [vmem:[%s6 + $0x30] sm:$0xff]
    %v1057 = vld [vmem:[%s6 + $0x38] sm:$0xff]
    %v1058 = vld [vmem:[%s6 + $0x40] sm:$0xff]
    %v1059 = vld [vmem:[%s6 + $0x48] sm:$0xff]
    %v1060 = vld [vmem:[%s6 + $0x50] sm:$0xff]
    %v1061 = vld [vmem:[%s6 + $0x58] sm:$0xff]
    %v1062 = vld [vmem:[%s6 + $0x60] sm:$0xff]
    %v1063 = vld [vmem:[%s6 + $0x68] sm:$0xff]
    %v1064 = vld [vmem:[%s6 + $0x70] sm:$0xff]
    %v1065 = vld [vmem:[%s6 + $0x78] sm:$0xff]
    %v1066 = vld [vmem:[%s7] sm:$0x1]
    %v1068 = vlaneseq
    %v1069 = vshrl.u32 %v1068, 7
    %v1070 = vsub.s32 0, %v1069
    %v1071 = vrot.slane %v1066, %v1070
    %1073 = vmatprep.subr.mxu0 0.0
    %1074 = vmatpush1.msra.mxu0 %v1050
    %1075 = vmatprep.subr.mxu0 0.0
    %1076 = vmatpush1.msra.mxu0 %v1051
    %1077 = vmatprep.subr.mxu0 0.0
    %1078 = vmatpush1.msra.mxu0 %v1052
    %1079 = vmatprep.subr.mxu0 0.0
    %1080 = vmatpush1.msra.mxu0 %v1053
    %1081 = vmatprep.subr.mxu0 0.0
    %1082 = vmatpush1.msra.mxu0 %v1054
    %1083 = vmatprep.subr.mxu0 0.0
    %1084 = vmatpush1.msra.mxu0 %v1055
    %1085 = vmatprep.subr.mxu0 0.0
    %1086 = vmatpush1.msra.mxu0 %v1056
    %1087 = vmatprep.subr.mxu0 0.0
    %1088 = vmatpush1.msra.mxu0 %v1057
    %1089 = vmatprep.subr.mxu0 0.0
    %1090 = vmatpush1.msra.mxu0 %v1058
    %1091 = vmatprep.subr.mxu0 0.0
    %1092 = vmatpush1.msra.mxu0 %v1059
    %1093 = vmatprep.subr.mxu0 0.0
    %1094 = vmatpush1.msra.mxu0 %v1060
    %1095 = vmatprep.subr.mxu0 0.0
    %1096 = vmatpush1.msra.mxu0 %v1061
    %1097 = vmatprep.subr.mxu0 0.0
    %1098 = vmatpush1.msra.mxu0 %v1062
    %1099 = vmatprep.subr.mxu0 0.0
    %1100 = vmatpush1.msra.mxu0 %v1063
    %1101 = vmatprep.subr.mxu0 0.0
    %1102 = vmatpush1.msra.mxu0 %v1064
    %1103 = vmatprep.subr.mxu0 0.0
    %1104 = vmatpush1.msra.mxu0 %v1065
    %1105 = vmatprep.subr.mxu0 0.0
    %1106 = vmatpush1.msra.mxu0 0.0
    %1107 = vmatprep.subr.mxu0 0.0
    %1108 = vmatpush1.msra.mxu0 0.0
    %1109 = vmatprep.subr.mxu0 0.0
    %1110 = vmatpush1.msra.mxu0 0.0
    %1111 = vmatprep.subr.mxu0 0.0
    %1112 = vmatpush1.msra.mxu0 0.0
    %1113 = vmatprep.subr.mxu0 0.0
    %1114 = vmatpush1.msra.mxu0 0.0
    %1115 = vmatprep.subr.mxu0 0.0
    %1116 = vmatpush1.msra.mxu0 0.0
    %1117 = vmatprep.subr.mxu0 0.0
    %1118 = vmatpush1.msra.mxu0 0.0
    %1119 = vmatprep.subr.mxu0 0.0
    %1120 = vmatpush1.msra.mxu0 0.0
    %1121 = vmatprep.subr.mxu0 0.0
    %1122 = vmatpush1.msra.mxu0 0.0
    %1123 = vmatprep.subr.mxu0 0.0
    %1124 = vmatpush1.msra.mxu0 0.0
    %1125 = vmatprep.subr.mxu0 0.0
    %1126 = vmatpush1.msra.mxu0 0.0
    %1127 = vmatprep.subr.mxu0 0.0
    %1128 = vmatpush1.msra.mxu0 0.0
    %1129 = vmatprep.subr.mxu0 0.0
    %1130 = vmatpush1.msra.mxu0 0.0
    %1131 = vmatprep.subr.mxu0 0.0
    %1132 = vmatpush1.msra.mxu0 0.0
    %1133 = vmatprep.subr.mxu0 0.0
    %1134 = vmatpush1.msra.mxu0 0.0
    %1135 = vmatprep.subr.mxu0 0.0
    %1136 = vmatpush1.msra.mxu0 0.0
    %1137 = vmatprep.mubr.f32.mxu0 0.0
    %1138 = vmatmul.mubr.f32.gmra.mrb[0].mxu0 %v1049
    %v1139 = vpop.f32.mrb[0].mxu0
    %v1140 = vadd.f32 %v1071, %v1139
    %v1141 = vpop.f32.mrb[0].mxu0
    %1142 = vdwg.mxu0
    %1143 = vst [vmem:[%s14] sm:$0x3] %v1140
    %v1144 = vld [vmem:[%s1] sm:$0x3]
    %v1145 = vmul.f32 %v1140, 0.5
    %v1146 = vmul.f32 %v1145, 1.442695
    %v1147 = vpow.pop %v1146
    %1149 = vrot.lane.b32.xlu0 %v1147, 96
    %v1150 = vpop.permute.xlu0 %1149
    %v1152 = vmul.f32 %v1144, %v1150
    %v1153 = vadd.f32 %v1152, %v1140
    %v1154 = vpack.c.bf16 %v1153, %v1153
    %v1155 = vld [vmem:[%s8] sm:$0xf]
    %v1156 = vld [vmem:[%s8 + $0x4] sm:$0xf]
    %v1157 = vld [vmem:[%s8 + $0x8] sm:$0xf]
    %v1158 = vld [vmem:[%s8 + $0xc] sm:$0xf]
    %v1159 = vld [vmem:[%s9] sm:$0x1]
    %v1161 = vlaneseq
    %v1162 = vshrl.u32 %v1161, 7
    %v1163 = vsub.s32 0, %v1162
    %v1164 = vrot.slane %v1159, %v1163
    %v1170 = vunpack.c.l.b16 %v1155
    %v1171 = vunpack.c.l.b16 %v1156
    %v1172 = vunpack.c.l.b16 %v1157
    %v1173 = vunpack.c.l.b16 %v1158
    %v1174 = vpack.c.b16 %v1171, %v1170
    %v1175 = vpack.c.b16 %v1173, %v1172
    %vm1178 = vcmask 261120
    %v1180 = vsel %vm1178, %v1154, 0
    %1182 = vmatprep.subr.bf16.mxu0 0
    %1183 = vmatpush1.bf16.msra.mxu0 %v1174
    %1184 = vmatprep.subr.bf16.mxu0 0
    %1185 = vmatpush1.bf16.msra.mxu0 %v1175
    %1186 = vmatprep.subr.bf16.mxu0 0
    %1187 = vmatpush1.bf16.msra.mxu0 0
    %1188 = vmatprep.subr.bf16.mxu0 0
    %1189 = vmatpush1.bf16.msra.mxu0 0
    %1190 = vmatprep.subr.bf16.mxu0 0
    %1191 = vmatpush1.bf16.msra.mxu0 0
    %1192 = vmatprep.subr.bf16.mxu0 0
    %1193 = vmatpush1.bf16.msra.mxu0 0
    %1194 = vmatprep.subr.bf16.mxu0 0
    %1195 = vmatpush1.bf16.msra.mxu0 0
    %1196 = vmatprep.subr.bf16.mxu0 0
    %1197 = vmatpush1.bf16.msra.mxu0 0
    %1198 = vmatprep.subr.bf16.mxu0 0
    %1199 = vmatpush1.bf16.msra.mxu0 0
    %1200 = vmatprep.subr.bf16.mxu0 0
    %1201 = vmatpush1.bf16.msra.mxu0 0
    %1202 = vmatprep.subr.bf16.mxu0 0
    %1203 = vmatpush1.bf16.msra.mxu0 0
    %1204 = vmatprep.subr.bf16.mxu0 0
    %1205 = vmatpush1.bf16.msra.mxu0 0
    %1206 = vmatprep.subr.bf16.mxu0 0
    %1207 = vmatpush1.bf16.msra.mxu0 0
    %1208 = vmatprep.subr.bf16.mxu0 0
    %1209 = vmatpush1.bf16.msra.mxu0 0
    %1210 = vmatprep.subr.bf16.mxu0 0
    %1211 = vmatpush1.bf16.msra.mxu0 0
    %1212 = vmatprep.subr.bf16.mxu0 0
    %1213 = vmatpush1.bf16.msra.mxu0 0
    %1214 = vmatprep.mubr.bf16.mxu0 0
    %1215 = vmatmul.mubr.bf16.gmra.mrb[0].mxu0 %v1180
    %v1216 = vpop.f32.mrb[0].mxu0
    %v1217 = vadd.f32 %v1164, %v1216
    %v1218 = vpop.f32.mrb[0].mxu0
    %v1219 = vpop.f32.mrb[0].mxu0
    %v1220 = vpop.f32.mrb[0].mxu0
    %1221 = vdwg.mxu0
    %v1222 = vmax.f32 %v1217, 0.0
    %v1223 = vpack.c.bf16 %v1222, %v1222
    %v1224 = vld [vmem:[%s10] sm:$0xff]
    %v1225 = vld [vmem:[%s10 + $0x8] sm:$0xff]
    %v1226 = vld [vmem:[%s10 + $0x10] sm:$0xff]
    %v1227 = vld [vmem:[%s10 + $0x18] sm:$0xff]
    %v1228 = vld [vmem:[%s10 + $0x20] sm:$0xff]
    %v1229 = vld [vmem:[%s10 + $0x28] sm:$0xff]
    %v1230 = vld [vmem:[%s10 + $0x30] sm:$0xff]
    %v1231 = vld [vmem:[%s10 + $0x38] sm:$0xff]
    %v1232 = vld [vmem:[%s10 + $0x40] sm:$0xff]
    %v1233 = vld [vmem:[%s10 + $0x48] sm:$0xff]
    %v1234 = vld [vmem:[%s10 + $0x50] sm:$0xff]
    %v1235 = vld [vmem:[%s10 + $0x58] sm:$0xff]
    %v1236 = vld [vmem:[%s10 + $0x60] sm:$0xff]
    %v1237 = vld [vmem:[%s10 + $0x68] sm:$0xff]
    %v1238 = vld [vmem:[%s10 + $0x70] sm:$0xff]
    %v1239 = vld [vmem:[%s10 + $0x78] sm:$0xff]
    %v1240 = vld [vmem:[%s11] sm:$0x3]
    %v1242 = vlaneseq
    %v1243 = vshrl.u32 %v1242, 7
    %v1244 = vsub.s32 0, %v1243
    %v1245 = vrot.slane %v1240, %v1244
    %v1246 = vlaneseq
    %v1247 = vshrl.u32 %v1246, 7
    %v1248 = vsub.s32 1, %v1247
    %v1249 = vrot.slane %v1240, %v1248
    %v1268 = vunpack.c.l.b16 %v1224
    %v1269 = vunpack.c.h.b16 %v1224
    %v1270 = vunpack.c.l.b16 %v1225
    %v1271 = vunpack.c.h.b16 %v1225
    %v1272 = vunpack.c.l.b16 %v1226
    %v1273 = vunpack.c.h.b16 %v1226
    %v1274 = vunpack.c.l.b16 %v1227
    %v1275 = vunpack.c.h.b16 %v1227
    %v1276 = vunpack.c.l.b16 %v1228
    %v1277 = vunpack.c.h.b16 %v1228
    %v1278 = vunpack.c.l.b16 %v1229
    %v1279 = vunpack.c.h.b16 %v1229
    %v1280 = vunpack.c.l.b16 %v1230
    %v1281 = vunpack.c.h.b16 %v1230
    %v1282 = vunpack.c.l.b16 %v1231
    %v1283 = vunpack.c.h.b16 %v1231
    %v1284 = vunpack.c.l.b16 %v1232
    %v1285 = vunpack.c.h.b16 %v1232
    %v1286 = vunpack.c.l.b16 %v1233
    %v1287 = vunpack.c.h.b16 %v1233
    %v1288 = vunpack.c.l.b16 %v1234
    %v1289 = vunpack.c.h.b16 %v1234
    %v1290 = vunpack.c.l.b16 %v1235
    %v1291 = vunpack.c.h.b16 %v1235
    %v1292 = vunpack.c.l.b16 %v1236
    %v1293 = vunpack.c.h.b16 %v1236
    %v1294 = vunpack.c.l.b16 %v1237
    %v1295 = vunpack.c.h.b16 %v1237
    %v1296 = vunpack.c.l.b16 %v1238
    %v1297 = vunpack.c.h.b16 %v1238
    %v1298 = vunpack.c.l.b16 %v1239
    %v1299 = vunpack.c.h.b16 %v1239
    %v1300 = vpack.c.b16 %v1270, %v1268
    %v1301 = vpack.c.b16 %v1271, %v1269
    %v1302 = vpack.c.b16 %v1274, %v1272
    %v1303 = vpack.c.b16 %v1275, %v1273
    %v1304 = vpack.c.b16 %v1278, %v1276
    %v1305 = vpack.c.b16 %v1279, %v1277
    %v1306 = vpack.c.b16 %v1282, %v1280
    %v1307 = vpack.c.b16 %v1283, %v1281
    %v1308 = vpack.c.b16 %v1286, %v1284
    %v1309 = vpack.c.b16 %v1287, %v1285
    %v1310 = vpack.c.b16 %v1290, %v1288
    %v1311 = vpack.c.b16 %v1291, %v1289
    %v1312 = vpack.c.b16 %v1294, %v1292
    %v1313 = vpack.c.b16 %v1295, %v1293
    %v1314 = vpack.c.b16 %v1298, %v1296
    %v1315 = vpack.c.b16 %v1299, %v1297
    %1332 = vmatprep.subr.bf16.mxu0 %v1301
    %1333 = vmatpush1.bf16.msra.mxu0 %v1300
    %1334 = vmatprep.subr.bf16.mxu0 %v1303
    %1335 = vmatpush1.bf16.msra.mxu0 %v1302
    %1336 = vmatprep.subr.bf16.mxu0 %v1305
    %1337 = vmatpush1.bf16.msra.mxu0 %v1304
    %1338 = vmatprep.subr.bf16.mxu0 %v1307
    %1339 = vmatpush1.bf16.msra.mxu0 %v1306
    %1340 = vmatprep.subr.bf16.mxu0 %v1309
    %1341 = vmatpush1.bf16.msra.mxu0 %v1308
    %1342 = vmatprep.subr.bf16.mxu0 %v1311
    %1343 = vmatpush1.bf16.msra.mxu0 %v1310
    %1344 = vmatprep.subr.bf16.mxu0 %v1313
    %1345 = vmatpush1.bf16.msra.mxu0 %v1312
    %1346 = vmatprep.subr.bf16.mxu0 %v1315
    %1347 = vmatpush1.bf16.msra.mxu0 %v1314
    %1348 = vmatprep.subr.bf16.mxu0 0
    %1349 = vmatpush1.bf16.msra.mxu0 0
    %1350 = vmatprep.subr.bf16.mxu0 0
    %1351 = vmatpush1.bf16.msra.mxu0 0
    %1352 = vmatprep.subr.bf16.mxu0 0
    %1353 = vmatpush1.bf16.msra.mxu0 0
    %1354 = vmatprep.subr.bf16.mxu0 0
    %1355 = vmatpush1.bf16.msra.mxu0 0
    %1356 = vmatprep.subr.bf16.mxu0 0
    %1357 = vmatpush1.bf16.msra.mxu0 0
    %1358 = vmatprep.subr.bf16.mxu0 0
    %1359 = vmatpush1.bf16.msra.mxu0 0
    %1360 = vmatprep.subr.bf16.mxu0 0
    %1361 = vmatpush1.bf16.msra.mxu0 0
    %1362 = vmatprep.subr.bf16.mxu0 0
    %1363 = vmatpush1.bf16.msra.mxu0 0
    %1364 = vmatprep.mubr.bf16.mxu0 0
    %1365 = vmatmul.mubr.bf16.gmra.mrb[0].mxu0 %v1223
    %v1366 = vpop.f32.mrb[0].mxu0
    %v1367 = vadd.f32 %v1245, %v1366
    %v1368 = vpop.f32.mrb[0].mxu0
    %v1369 = vadd.f32 %v1249, %v1368
    %v1370 = vpop.f32.mrb[0].mxu0
    %v1371 = vpop.f32.mrb[0].mxu0
    %1372 = vdwg.mxu0
    %v1373 = vmax.f32 %v1367, 0.0
    %v1374 = vmax.f32 %v1369, 0.0
    %v1375 = vpack.c.bf16 %v1373, %v1373
    %v1376 = vpack.c.bf16 %v1374, %v1374
    %v1377 = vld [vmem:[%s12] sm:$0xff]
    %v1378 = vld [vmem:[%s12 + $0x8] sm:$0xff]
    %v1379 = vld [vmem:[%s12 + $0x10] sm:$0xff]
    %v1380 = vld [vmem:[%s12 + $0x18] sm:$0xf]
    %v1381 = vld [vmem:[%s12 + $0x1c] sm:$0xff]
    %v1382 = vld [vmem:[%s12 + $0x24] sm:$0xff]
    %v1383 = vld [vmem:[%s12 + $0x2c] sm:$0xff]
    %v1384 = vld [vmem:[%s12 + $0x34] sm:$0xf]
    %v1385 = vld [vmem:[%s12 + $0x38] sm:$0xff]
    %v1386 = vld [vmem:[%s12 + $0x40] sm:$0xff]
    %v1387 = vld [vmem:[%s12 + $0x48] sm:$0xff]
    %v1388 = vld [vmem:[%s12 + $0x50] sm:$0xf]
    %v1389 = vld [vmem:[%s12 + $0x54] sm:$0xff]
    %v1390 = vld [vmem:[%s12 + $0x5c] sm:$0xff]
    %v1391 = vld [vmem:[%s12 + $0x64] sm:$0xff]
    %v1392 = vld [vmem:[%s12 + $0x6c] sm:$0xf]
    %v1393 = vld [vmem:[%s12 + $0x70] sm:$0xff]
    %v1394 = vld [vmem:[%s12 + $0x78] sm:$0xff]
    %v1395 = vld [vmem:[%s12 + $0x80] sm:$0xff]
    %v1396 = vld [vmem:[%s12 + $0x88] sm:$0xf]
    %v1397 = vld [vmem:[%s12 + $0x8c] sm:$0xff]
    %v1398 = vld [vmem:[%s12 + $0x94] sm:$0xff]
    %v1399 = vld [vmem:[%s12 + $0x9c] sm:$0xff]
    %v1400 = vld [vmem:[%s12 + $0xa4] sm:$0xf]
    %v1401 = vld [vmem:[%s12 + $0xa8] sm:$0xff]
    %v1402 = vld [vmem:[%s12 + $0xb0] sm:$0xff]
    %v1403 = vld [vmem:[%s12 + $0xb8] sm:$0xff]
    %v1404 = vld [vmem:[%s12 + $0xc0] sm:$0xf]
    %v1405 = vld [vmem:[%s12 + $0xc4] sm:$0xff]
    %v1406 = vld [vmem:[%s12 + $0xcc] sm:$0xff]
    %v1407 = vld [vmem:[%s12 + $0xd4] sm:$0xff]
    %v1408 = vld [vmem:[%s12 + $0xdc] sm:$0xf]
    %v1409 = vld [vmem:[%s12 + $0xe0] sm:$0xff]
    %v1410 = vld [vmem:[%s12 + $0xe8] sm:$0xff]
    %v1411 = vld [vmem:[%s12 + $0xf0] sm:$0xff]
    %v1412 = vld [vmem:[%s12 + $0xf8] sm:$0xf]
    %v1413 = vld [vmem:[%s12 + $0xfc] sm:$0xff]
    %v1414 = vld [vmem:[%s12 + $0x104] sm:$0xff]
    %v1415 = vld [vmem:[%s12 + $0x10c] sm:$0xff]
    %v1416 = vld [vmem:[%s12 + $0x114] sm:$0xf]
    %v1417 = vld [vmem:[%s12 + $0x118] sm:$0xff]
    %v1418 = vld [vmem:[%s12 + $0x120] sm:$0xff]
    %v1419 = vld [vmem:[%s12 + $0x128] sm:$0xff]
    %v1420 = vld [vmem:[%s12 + $0x130] sm:$0xf]
    %v1421 = vld [vmem:[%s12 + $0x134] sm:$0xff]
    %v1422 = vld [vmem:[%s12 + $0x13c] sm:$0xff]
    %v1423 = vld [vmem:[%s12 + $0x144] sm:$0xff]
    %v1424 = vld [vmem:[%s12 + $0x14c] sm:$0xf]
    %v1425 = vld [vmem:[%s12 + $0x150] sm:$0xff]
    %v1426 = vld [vmem:[%s12 + $0x158] sm:$0xff]
    %v1427 = vld [vmem:[%s12 + $0x160] sm:$0xff]
    %v1428 = vld [vmem:[%s12 + $0x168] sm:$0xf]
    %v1429 = vld [vmem:[%s12 + $0x16c] sm:$0xff]
    %v1430 = vld [vmem:[%s12 + $0x174] sm:$0xff]
    %v1431 = vld [vmem:[%s12 + $0x17c] sm:$0xff]
    %v1432 = vld [vmem:[%s12 + $0x184] sm:$0xf]
    %v1433 = vld [vmem:[%s12 + $0x188] sm:$0xff]
    %v1434 = vld [vmem:[%s12 + $0x190] sm:$0xff]
    %v1435 = vld [vmem:[%s12 + $0x198] sm:$0xff]
    %v1436 = vld [vmem:[%s12 + $0x1a0] sm:$0xf]
    %v1437 = vld [vmem:[%s12 + $0x1a4] sm:$0xff]
    %v1438 = vld [vmem:[%s12 + $0x1ac] sm:$0xff]
    %v1439 = vld [vmem:[%s12 + $0x1b4] sm:$0xff]
    %v1440 = vld [vmem:[%s12 + $0x1bc] sm:$0xf]
    %v1441 = vld [vmem:[%s12 + $0x1c0] sm:$0xff]
    %v1442 = vld [vmem:[%s12 + $0x1c8] sm:$0xff]
    %v1443 = vld [vmem:[%s12 + $0x1d0] sm:$0xff]
    %v1444 = vld [vmem:[%s12 + $0x1d8] sm:$0xf]
    %v1445 = vld [vmem:[%s12 + $0x1dc] sm:$0xff]
    %v1446 = vld [vmem:[%s12 + $0x1e4] sm:$0xff]
    %v1447 = vld [vmem:[%s12 + $0x1ec] sm:$0xff]
    %v1448 = vld [vmem:[%s12 + $0x1f4] sm:$0xf]
    %v1449 = vld [vmem:[%s12 + $0x1f8] sm:$0xff]
    %v1450 = vld [vmem:[%s12 + $0x200] sm:$0xff]
    %v1451 = vld [vmem:[%s12 + $0x208] sm:$0xff]
    %v1452 = vld [vmem:[%s12 + $0x210] sm:$0xf]
    %v1453 = vld [vmem:[%s12 + $0x214] sm:$0xff]
    %v1454 = vld [vmem:[%s12 + $0x21c] sm:$0xff]
    %v1455 = vld [vmem:[%s12 + $0x224] sm:$0xff]
    %v1456 = vld [vmem:[%s12 + $0x22c] sm:$0xf]
    %v1457 = vld [vmem:[%s12 + $0x230] sm:$0xff]
    %v1458 = vld [vmem:[%s12 + $0x238] sm:$0xff]
    %v1459 = vld [vmem:[%s12 + $0x240] sm:$0xff]
    %v1460 = vld [vmem:[%s12 + $0x248] sm:$0xf]
    %v1461 = vld [vmem:[%s12 + $0x24c] sm:$0xff]
    %v1462 = vld [vmem:[%s12 + $0x254] sm:$0xff]
    %v1463 = vld [vmem:[%s12 + $0x25c] sm:$0xff]
    %v1464 = vld [vmem:[%s12 + $0x264] sm:$0xf]
    %v1465 = vld [vmem:[%s12 + $0x268] sm:$0xff]
    %v1466 = vld [vmem:[%s12 + $0x270] sm:$0xff]
    %v1467 = vld [vmem:[%s12 + $0x278] sm:$0xff]
    %v1468 = vld [vmem:[%s12 + $0x280] sm:$0xf]
    %v1469 = vld [vmem:[%s12 + $0x284] sm:$0xff]
    %v1470 = vld [vmem:[%s12 + $0x28c] sm:$0xff]
    %v1471 = vld [vmem:[%s12 + $0x294] sm:$0xff]
    %v1472 = vld [vmem:[%s12 + $0x29c] sm:$0xf]
    %v1473 = vld [vmem:[%s12 + $0x2a0] sm:$0xff]
    %v1474 = vld [vmem:[%s12 + $0x2a8] sm:$0xff]
    %v1475 = vld [vmem:[%s12 + $0x2b0] sm:$0xff]
    %v1476 = vld [vmem:[%s12 + $0x2b8] sm:$0xf]
    %v1477 = vld [vmem:[%s12 + $0x2bc] sm:$0xff]
    %v1478 = vld [vmem:[%s12 + $0x2c4] sm:$0xff]
    %v1479 = vld [vmem:[%s12 + $0x2cc] sm:$0xff]
    %v1480 = vld [vmem:[%s12 + $0x2d4] sm:$0xf]
    %v1481 = vld [vmem:[%s12 + $0x2d8] sm:$0xff]
    %v1482 = vld [vmem:[%s12 + $0x2e0] sm:$0xff]
    %v1483 = vld [vmem:[%s12 + $0x2e8] sm:$0xff]
    %v1484 = vld [vmem:[%s12 + $0x2f0] sm:$0xf]
    %v1485 = vld [vmem:[%s12 + $0x2f4] sm:$0xff]
    %v1486 = vld [vmem:[%s12 + $0x2fc] sm:$0xff]
    %v1487 = vld [vmem:[%s12 + $0x304] sm:$0xff]
    %v1488 = vld [vmem:[%s12 + $0x30c] sm:$0xf]
    %v1489 = vld [vmem:[%s12 + $0x310] sm:$0xff]
    %v1490 = vld [vmem:[%s12 + $0x318] sm:$0xff]
    %v1491 = vld [vmem:[%s12 + $0x320] sm:$0xff]
    %v1492 = vld [vmem:[%s12 + $0x328] sm:$0xf]
    %v1493 = vld [vmem:[%s12 + $0x32c] sm:$0xff]
    %v1494 = vld [vmem:[%s12 + $0x334] sm:$0xff]
    %v1495 = vld [vmem:[%s12 + $0x33c] sm:$0xff]
    %v1496 = vld [vmem:[%s12 + $0x344] sm:$0xf]
    %v1497 = vld [vmem:[%s12 + $0x348] sm:$0xff]
    %v1498 = vld [vmem:[%s12 + $0x350] sm:$0xff]
    %v1499 = vld [vmem:[%s12 + $0x358] sm:$0xff]
    %v1500 = vld [vmem:[%s12 + $0x360] sm:$0xf]
    %v1501 = vld [vmem:[%s12 + $0x364] sm:$0xff]
    %v1502 = vld [vmem:[%s12 + $0x36c] sm:$0xff]
    %v1503 = vld [vmem:[%s12 + $0x374] sm:$0xff]
    %v1504 = vld [vmem:[%s12 + $0x37c] sm:$0xf]
    %v1505 = vld [vmem:[%s13] sm:$0x7f]
    %v1507 = vlaneseq
    %v1508 = vshrl.u32 %v1507, 7
    %v1509 = vsub.s32 0, %v1508
    %v1510 = vrot.slane %v1505, %v1509
    %v1511 = vlaneseq
    %v1512 = vshrl.u32 %v1511, 7
    %v1513 = vsub.s32 1, %v1512
    %v1514 = vrot.slane %v1505, %v1513
    %v1515 = vlaneseq
    %v1516 = vshrl.u32 %v1515, 7
    %v1517 = vsub.s32 2, %v1516
    %v1518 = vrot.slane %v1505, %v1517
    %v1519 = vlaneseq
    %v1520 = vshrl.u32 %v1519, 7
    %v1521 = vsub.s32 3, %v1520
    %v1522 = vrot.slane %v1505, %v1521
    %v1523 = vlaneseq
    %v1524 = vshrl.u32 %v1523, 7
    %v1525 = vsub.s32 4, %v1524
    %v1526 = vrot.slane %v1505, %v1525
    %v1527 = vlaneseq
    %v1528 = vshrl.u32 %v1527, 7
    %v1529 = vsub.s32 5, %v1528
    %v1530 = vrot.slane %v1505, %v1529
    %v1531 = vlaneseq
    %v1532 = vshrl.u32 %v1531, 7
    %v1533 = vsub.s32 6, %v1532
    %v1534 = vrot.slane %v1505, %v1533
    %v1670 = vunpack.c.l.b16 %v1377
    %v1671 = vunpack.c.h.b16 %v1377
    %v1672 = vunpack.c.l.b16 %v1378
    %v1673 = vunpack.c.h.b16 %v1378
    %v1674 = vunpack.c.l.b16 %v1379
    %v1675 = vunpack.c.h.b16 %v1379
    %v1676 = vunpack.c.l.b16 %v1380
    %v1677 = vunpack.c.l.b16 %v1381
    %v1678 = vunpack.c.h.b16 %v1381
    %v1679 = vunpack.c.l.b16 %v1382
    %v1680 = vunpack.c.h.b16 %v1382
    %v1681 = vunpack.c.l.b16 %v1383
    %v1682 = vunpack.c.h.b16 %v1383
    %v1683 = vunpack.c.l.b16 %v1384
    %v1684 = vunpack.c.l.b16 %v1385
    %v1685 = vunpack.c.h.b16 %v1385
    %v1686 = vunpack.c.l.b16 %v1386
    %v1687 = vunpack.c.h.b16 %v1386
    %v1688 = vunpack.c.l.b16 %v1387
    %v1689 = vunpack.c.h.b16 %v1387
    %v1690 = vunpack.c.l.b16 %v1388
    %v1691 = vunpack.c.l.b16 %v1389
    %v1692 = vunpack.c.h.b16 %v1389
    %v1693 = vunpack.c.l.b16 %v1390
    %v1694 = vunpack.c.h.b16 %v1390
    %v1695 = vunpack.c.l.b16 %v1391
    %v1696 = vunpack.c.h.b16 %v1391
    %v1697 = vunpack.c.l.b16 %v1392
    %v1698 = vunpack.c.l.b16 %v1393
    %v1699 = vunpack.c.h.b16 %v1393
    %v1700 = vunpack.c.l.b16 %v1394
    %v1701 = vunpack.c.h.b16 %v1394
    %v1702 = vunpack.c.l.b16 %v1395
    %v1703 = vunpack.c.h.b16 %v1395
    %v1704 = vunpack.c.l.b16 %v1396
    %v1705 = vunpack.c.l.b16 %v1397
    %v1706 = vunpack.c.h.b16 %v1397
    %v1707 = vunpack.c.l.b16 %v1398
    %v1708 = vunpack.c.h.b16 %v1398
    %v1709 = vunpack.c.l.b16 %v1399
    %v1710 = vunpack.c.h.b16 %v1399
    %v1711 = vunpack.c.l.b16 %v1400
    %v1712 = vunpack.c.l.b16 %v1401
    %v1713 = vunpack.c.h.b16 %v1401
    %v1714 = vunpack.c.l.b16 %v1402
    %v1715 = vunpack.c.h.b16 %v1402
    %v1716 = vunpack.c.l.b16 %v1403
    %v1717 = vunpack.c.h.b16 %v1403
    %v1718 = vunpack.c.l.b16 %v1404
    %v1719 = vunpack.c.l.b16 %v1405
    %v1720 = vunpack.c.h.b16 %v1405
    %v1721 = vunpack.c.l.b16 %v1406
    %v1722 = vunpack.c.h.b16 %v1406
    %v1723 = vunpack.c.l.b16 %v1407
    %v1724 = vunpack.c.h.b16 %v1407
    %v1725 = vunpack.c.l.b16 %v1408
    %v1726 = vunpack.c.l.b16 %v1409
    %v1727 = vunpack.c.h.b16 %v1409
    %v1728 = vunpack.c.l.b16 %v1410
    %v1729 = vunpack.c.h.b16 %v1410
    %v1730 = vunpack.c.l.b16 %v1411
    %v1731 = vunpack.c.h.b16 %v1411
    %v1732 = vunpack.c.l.b16 %v1412
    %v1733 = vunpack.c.l.b16 %v1413
    %v1734 = vunpack.c.h.b16 %v1413
    %v1735 = vunpack.c.l.b16 %v1414
    %v1736 = vunpack.c.h.b16 %v1414
    %v1737 = vunpack.c.l.b16 %v1415
    %v1738 = vunpack.c.h.b16 %v1415
    %v1739 = vunpack.c.l.b16 %v1416
    %v1740 = vunpack.c.l.b16 %v1417
    %v1741 = vunpack.c.h.b16 %v1417
    %v1742 = vunpack.c.l.b16 %v1418
    %v1743 = vunpack.c.h.b16 %v1418
    %v1744 = vunpack.c.l.b16 %v1419
    %v1745 = vunpack.c.h.b16 %v1419
    %v1746 = vunpack.c.l.b16 %v1420
    %v1747 = vunpack.c.l.b16 %v1421
    %v1748 = vunpack.c.h.b16 %v1421
    %v1749 = vunpack.c.l.b16 %v1422
    %v1750 = vunpack.c.h.b16 %v1422
    %v1751 = vunpack.c.l.b16 %v1423
    %v1752 = vunpack.c.h.b16 %v1423
    %v1753 = vunpack.c.l.b16 %v1424
    %v1754 = vunpack.c.l.b16 %v1425
    %v1755 = vunpack.c.h.b16 %v1425
    %v1756 = vunpack.c.l.b16 %v1426
    %v1757 = vunpack.c.h.b16 %v1426
    %v1758 = vunpack.c.l.b16 %v1427
    %v1759 = vunpack.c.h.b16 %v1427
    %v1760 = vunpack.c.l.b16 %v1428
    %v1761 = vunpack.c.l.b16 %v1429
    %v1762 = vunpack.c.h.b16 %v1429
    %v1763 = vunpack.c.l.b16 %v1430
    %v1764 = vunpack.c.h.b16 %v1430
    %v1765 = vunpack.c.l.b16 %v1431
    %v1766 = vunpack.c.h.b16 %v1431
    %v1767 = vunpack.c.l.b16 %v1432
    %v1768 = vunpack.c.l.b16 %v1433
    %v1769 = vunpack.c.h.b16 %v1433
    %v1770 = vunpack.c.l.b16 %v1434
    %v1771 = vunpack.c.h.b16 %v1434
    %v1772 = vunpack.c.l.b16 %v1435
    %v1773 = vunpack.c.h.b16 %v1435
    %v1774 = vunpack.c.l.b16 %v1436
    %v1775 = vunpack.c.l.b16 %v1437
    %v1776 = vunpack.c.h.b16 %v1437
    %v1777 = vunpack.c.l.b16 %v1438
    %v1778 = vunpack.c.h.b16 %v1438
    %v1779 = vunpack.c.l.b16 %v1439
    %v1780 = vunpack.c.h.b16 %v1439
    %v1781 = vunpack.c.l.b16 %v1440
    %v1782 = vunpack.c.l.b16 %v1441
    %v1783 = vunpack.c.h.b16 %v1441
    %v1784 = vunpack.c.l.b16 %v1442
    %v1785 = vunpack.c.h.b16 %v1442
    %v1786 = vunpack.c.l.b16 %v1443
    %v1787 = vunpack.c.h.b16 %v1443
    %v1788 = vunpack.c.l.b16 %v1444
    %v1789 = vunpack.c.l.b16 %v1445
    %v1790 = vunpack.c.h.b16 %v1445
    %v1791 = vunpack.c.l.b16 %v1446
    %v1792 = vunpack.c.h.b16 %v1446
    %v1793 = vunpack.c.l.b16 %v1447
    %v1794 = vunpack.c.h.b16 %v1447
    %v1795 = vunpack.c.l.b16 %v1448
    %v1796 = vunpack.c.l.b16 %v1449
    %v1797 = vunpack.c.h.b16 %v1449
    %v1798 = vunpack.c.l.b16 %v1450
    %v1799 = vunpack.c.h.b16 %v1450
    %v1800 = vunpack.c.l.b16 %v1451
    %v1801 = vunpack.c.h.b16 %v1451
    %v1802 = vunpack.c.l.b16 %v1452
    %v1803 = vunpack.c.l.b16 %v1453
    %v1804 = vunpack.c.h.b16 %v1453
    %v1805 = vunpack.c.l.b16 %v1454
    %v1806 = vunpack.c.h.b16 %v1454
    %v1807 = vunpack.c.l.b16 %v1455
    %v1808 = vunpack.c.h.b16 %v1455
    %v1809 = vunpack.c.l.b16 %v1456
    %v1810 = vunpack.c.l.b16 %v1457
    %v1811 = vunpack.c.h.b16 %v1457
    %v1812 = vunpack.c.l.b16 %v1458
    %v1813 = vunpack.c.h.b16 %v1458
    %v1814 = vunpack.c.l.b16 %v1459
    %v1815 = vunpack.c.h.b16 %v1459
    %v1816 = vunpack.c.l.b16 %v1460
    %v1817 = vunpack.c.l.b16 %v1461
    %v1818 = vunpack.c.h.b16 %v1461
    %v1819 = vunpack.c.l.b16 %v1462
    %v1820 = vunpack.c.h.b16 %v1462
    %v1821 = vunpack.c.l.b16 %v1463
    %v1822 = vunpack.c.h.b16 %v1463
    %v1823 = vunpack.c.l.b16 %v1464
    %v1824 = vunpack.c.l.b16 %v1465
    %v1825 = vunpack.c.h.b16 %v1465
    %v1826 = vunpack.c.l.b16 %v1466
    %v1827 = vunpack.c.h.b16 %v1466
    %v1828 = vunpack.c.l.b16 %v1467
    %v1829 = vunpack.c.h.b16 %v1467
    %v1830 = vunpack.c.l.b16 %v1468
    %v1831 = vunpack.c.l.b16 %v1469
    %v1832 = vunpack.c.h.b16 %v1469
    %v1833 = vunpack.c.l.b16 %v1470
    %v1834 = vunpack.c.h.b16 %v1470
    %v1835 = vunpack.c.l.b16 %v1471
    %v1836 = vunpack.c.h.b16 %v1471
    %v1837 = vunpack.c.l.b16 %v1472
    %v1838 = vunpack.c.l.b16 %v1473
    %v1839 = vunpack.c.h.b16 %v1473
    %v1840 = vunpack.c.l.b16 %v1474
    %v1841 = vunpack.c.h.b16 %v1474
    %v1842 = vunpack.c.l.b16 %v1475
    %v1843 = vunpack.c.h.b16 %v1475
    %v1844 = vunpack.c.l.b16 %v1476
    %v1845 = vunpack.c.l.b16 %v1477
    %v1846 = vunpack.c.h.b16 %v1477
    %v1847 = vunpack.c.l.b16 %v1478
    %v1848 = vunpack.c.h.b16 %v1478
    %v1849 = vunpack.c.l.b16 %v1479
    %v1850 = vunpack.c.h.b16 %v1479
    %v1851 = vunpack.c.l.b16 %v1480
    %v1852 = vunpack.c.l.b16 %v1481
    %v1853 = vunpack.c.h.b16 %v1481
    %v1854 = vunpack.c.l.b16 %v1482
    %v1855 = vunpack.c.h.b16 %v1482
    %v1856 = vunpack.c.l.b16 %v1483
    %v1857 = vunpack.c.h.b16 %v1483
    %v1858 = vunpack.c.l.b16 %v1484
    %v1859 = vunpack.c.l.b16 %v1485
    %v1860 = vunpack.c.h.b16 %v1485
    %v1861 = vunpack.c.l.b16 %v1486
    %v1862 = vunpack.c.h.b16 %v1486
    %v1863 = vunpack.c.l.b16 %v1487
    %v1864 = vunpack.c.h.b16 %v1487
    %v1865 = vunpack.c.l.b16 %v1488
    %v1866 = vunpack.c.l.b16 %v1489
    %v1867 = vunpack.c.h.b16 %v1489
    %v1868 = vunpack.c.l.b16 %v1490
    %v1869 = vunpack.c.h.b16 %v1490
    %v1870 = vunpack.c.l.b16 %v1491
    %v1871 = vunpack.c.h.b16 %v1491
    %v1872 = vunpack.c.l.b16 %v1492
    %v1873 = vunpack.c.l.b16 %v1493
    %v1874 = vunpack.c.h.b16 %v1493
    %v1875 = vunpack.c.l.b16 %v1494
    %v1876 = vunpack.c.h.b16 %v1494
    %v1877 = vunpack.c.l.b16 %v1495
    %v1878 = vunpack.c.h.b16 %v1495
    %v1879 = vunpack.c.l.b16 %v1496
    %v1880 = vunpack.c.l.b16 %v1497
    %v1881 = vunpack.c.h.b16 %v1497
    %v1882 = vunpack.c.l.b16 %v1498
    %v1883 = vunpack.c.h.b16 %v1498
    %v1884 = vunpack.c.l.b16 %v1499
    %v1885 = vunpack.c.h.b16 %v1499
    %v1886 = vunpack.c.l.b16 %v1500
    %v1887 = vunpack.c.l.b16 %v1501
    %v1888 = vunpack.c.h.b16 %v1501
    %v1889 = vunpack.c.l.b16 %v1502
    %v1890 = vunpack.c.h.b16 %v1502
    %v1891 = vunpack.c.l.b16 %v1503
    %v1892 = vunpack.c.h.b16 %v1503
    %v1893 = vunpack.c.l.b16 %v1504
    %v1894 = vpack.c.b16 %v1677, %v1670
    %v1895 = vpack.c.b16 %v1678, %v1671
    %v1896 = vpack.c.b16 %v1679, %v1672
    %v1897 = vpack.c.b16 %v1680, %v1673
    %v1898 = vpack.c.b16 %v1681, %v1674
    %v1899 = vpack.c.b16 %v1682, %v1675
    %v1900 = vpack.c.b16 %v1683, %v1676
    %v1901 = vpack.c.b16 %v1691, %v1684
    %v1902 = vpack.c.b16 %v1692, %v1685
    %v1903 = vpack.c.b16 %v1693, %v1686
    %v1904 = vpack.c.b16 %v1694, %v1687
    %v1905 = vpack.c.b16 %v1695, %v1688
    %v1906 = vpack.c.b16 %v1696, %v1689
    %v1907 = vpack.c.b16 %v1697, %v1690
    %v1908 = vpack.c.b16 %v1705, %v1698
    %v1909 = vpack.c.b16 %v1706, %v1699
    %v1910 = vpack.c.b16 %v1707, %v1700
    %v1911 = vpack.c.b16 %v1708, %v1701
    %v1912 = vpack.c.b16 %v1709, %v1702
    %v1913 = vpack.c.b16 %v1710, %v1703
    %v1914 = vpack.c.b16 %v1711, %v1704
    %v1915 = vpack.c.b16 %v1719, %v1712
    %v1916 = vpack.c.b16 %v1720, %v1713
    %v1917 = vpack.c.b16 %v1721, %v1714
    %v1918 = vpack.c.b16 %v1722, %v1715
    %v1919 = vpack.c.b16 %v1723, %v1716
    %v1920 = vpack.c.b16 %v1724, %v1717
    %v1921 = vpack.c.b16 %v1725, %v1718
    %v1922 = vpack.c.b16 %v1733, %v1726
    %v1923 = vpack.c.b16 %v1734, %v1727
    %v1924 = vpack.c.b16 %v1735, %v1728
    %v1925 = vpack.c.b16 %v1736, %v1729
    %v1926 = vpack.c.b16 %v1737, %v1730
    %v1927 = vpack.c.b16 %v1738, %v1731
    %v1928 = vpack.c.b16 %v1739, %v1732
    %v1929 = vpack.c.b16 %v1747, %v1740
    %v1930 = vpack.c.b16 %v1748, %v1741
    %v1931 = vpack.c.b16 %v1749, %v1742
    %v1932 = vpack.c.b16 %v1750, %v1743
    %v1933 = vpack.c.b16 %v1751, %v1744
    %v1934 = vpack.c.b16 %v1752, %v1745
    %v1935 = vpack.c.b16 %v1753, %v1746
    %v1936 = vpack.c.b16 %v1761, %v1754
    %v1937 = vpack.c.b16 %v1762, %v1755
    %v1938 = vpack.c.b16 %v1763, %v1756
    %v1939 = vpack.c.b16 %v1764, %v1757
    %v1940 = vpack.c.b16 %v1765, %v1758
    %v1941 = vpack.c.b16 %v1766, %v1759
    %v1942 = vpack.c.b16 %v1767, %v1760
    %v1943 = vpack.c.b16 %v1775, %v1768
    %v1944 = vpack.c.b16 %v1776, %v1769
    %v1945 = vpack.c.b16 %v1777, %v1770
    %v1946 = vpack.c.b16 %v1778, %v1771
    %v1947 = vpack.c.b16 %v1779, %v1772
    %v1948 = vpack.c.b16 %v1780, %v1773
    %v1949 = vpack.c.b16 %v1781, %v1774
    %v1950 = vpack.c.b16 %v1789, %v1782
    %v1951 = vpack.c.b16 %v1790, %v1783
    %v1952 = vpack.c.b16 %v1791, %v1784
    %v1953 = vpack.c.b16 %v1792, %v1785
    %v1954 = vpack.c.b16 %v1793, %v1786
    %v1955 = vpack.c.b16 %v1794, %v1787
    %v1956 = vpack.c.b16 %v1795, %v1788
    %v1957 = vpack.c.b16 %v1803, %v1796
    %v1958 = vpack.c.b16 %v1804, %v1797
    %v1959 = vpack.c.b16 %v1805, %v1798
    %v1960 = vpack.c.b16 %v1806, %v1799
    %v1961 = vpack.c.b16 %v1807, %v1800
    %v1962 = vpack.c.b16 %v1808, %v1801
    %v1963 = vpack.c.b16 %v1809, %v1802
    %v1964 = vpack.c.b16 %v1817, %v1810
    %v1965 = vpack.c.b16 %v1818, %v1811
    %v1966 = vpack.c.b16 %v1819, %v1812
    %v1967 = vpack.c.b16 %v1820, %v1813
    %v1968 = vpack.c.b16 %v1821, %v1814
    %v1969 = vpack.c.b16 %v1822, %v1815
    %v1970 = vpack.c.b16 %v1823, %v1816
    %v1971 = vpack.c.b16 %v1831, %v1824
    %v1972 = vpack.c.b16 %v1832, %v1825
    %v1973 = vpack.c.b16 %v1833, %v1826
    %v1974 = vpack.c.b16 %v1834, %v1827
    %v1975 = vpack.c.b16 %v1835, %v1828
    %v1976 = vpack.c.b16 %v1836, %v1829
    %v1977 = vpack.c.b16 %v1837, %v1830
    %v1978 = vpack.c.b16 %v1845, %v1838
    %v1979 = vpack.c.b16 %v1846, %v1839
    %v1980 = vpack.c.b16 %v1847, %v1840
    %v1981 = vpack.c.b16 %v1848, %v1841
    %v1982 = vpack.c.b16 %v1849, %v1842
    %v1983 = vpack.c.b16 %v1850, %v1843
    %v1984 = vpack.c.b16 %v1851, %v1844
    %v1985 = vpack.c.b16 %v1859, %v1852
    %v1986 = vpack.c.b16 %v1860, %v1853
    %v1987 = vpack.c.b16 %v1861, %v1854
    %v1988 = vpack.c.b16 %v1862, %v1855
    %v1989 = vpack.c.b16 %v1863, %v1856
    %v1990 = vpack.c.b16 %v1864, %v1857
    %v1991 = vpack.c.b16 %v1865, %v1858
    %v1992 = vpack.c.b16 %v1873, %v1866
    %v1993 = vpack.c.b16 %v1874, %v1867
    %v1994 = vpack.c.b16 %v1875, %v1868
    %v1995 = vpack.c.b16 %v1876, %v1869
    %v1996 = vpack.c.b16 %v1877, %v1870
    %v1997 = vpack.c.b16 %v1878, %v1871
    %v1998 = vpack.c.b16 %v1879, %v1872
    %v1999 = vpack.c.b16 %v1887, %v1880
    %v2000 = vpack.c.b16 %v1888, %v1881
    %v2001 = vpack.c.b16 %v1889, %v1882
    %v2002 = vpack.c.b16 %v1890, %v1883
    %v2003 = vpack.c.b16 %v1891, %v1884
    %v2004 = vpack.c.b16 %v1892, %v1885
    %v2005 = vpack.c.b16 %v1893, %v1886
    %2118 = vmatprep.subr.bf16.mxu0 %v1895
    %2119 = vmatpush1.bf16.msra.mxu0 %v1894
    %2120 = vmatprep.subr.bf16.mxu0 %v1902
    %2121 = vmatpush1.bf16.msra.mxu0 %v1901
    %2122 = vmatprep.subr.bf16.mxu0 %v1909
    %2123 = vmatpush1.bf16.msra.mxu0 %v1908
    %2124 = vmatprep.subr.bf16.mxu0 %v1916
    %2125 = vmatpush1.bf16.msra.mxu0 %v1915
    %2126 = vmatprep.subr.bf16.mxu0 %v1923
    %2127 = vmatpush1.bf16.msra.mxu0 %v1922
    %2128 = vmatprep.subr.bf16.mxu0 %v1930
    %2129 = vmatpush1.bf16.msra.mxu0 %v1929
    %2130 = vmatprep.subr.bf16.mxu0 %v1937
    %2131 = vmatpush1.bf16.msra.mxu0 %v1936
    %2132 = vmatprep.subr.bf16.mxu0 %v1944
    %2133 = vmatpush1.bf16.msra.mxu0 %v1943
    %2134 = vmatprep.subr.bf16.mxu0 %v1951
    %2135 = vmatpush1.bf16.msra.mxu0 %v1950
    %2136 = vmatprep.subr.bf16.mxu0 %v1958
    %2137 = vmatpush1.bf16.msra.mxu0 %v1957
    %2138 = vmatprep.subr.bf16.mxu0 %v1965
    %2139 = vmatpush1.bf16.msra.mxu0 %v1964
    %2140 = vmatprep.subr.bf16.mxu0 %v1972
    %2141 = vmatpush1.bf16.msra.mxu0 %v1971
    %2142 = vmatprep.subr.bf16.mxu0 %v1979
    %2143 = vmatpush1.bf16.msra.mxu0 %v1978
    %2144 = vmatprep.subr.bf16.mxu0 %v1986
    %2145 = vmatpush1.bf16.msra.mxu0 %v1985
    %2146 = vmatprep.subr.bf16.mxu0 %v1993
    %2147 = vmatpush1.bf16.msra.mxu0 %v1992
    %2148 = vmatprep.subr.bf16.mxu0 %v2000
    %2149 = vmatpush1.bf16.msra.mxu0 %v1999
    %2150 = vmatprep.mubr.bf16.mxu0 %v1376
    %2151 = vmatmul.mubr.bf16.gmra.mrb[0].mxu0 %v1375
    %v2152 = vpop.f32.mrb[0].mxu0
    %v2153 = vadd.f32 %v1510, %v2152
    %v2154 = vpop.f32.mrb[0].mxu0
    %v2155 = vadd.f32 %v1514, %v2154
    %v2156 = vpop.f32.mrb[0].mxu0
    %v2157 = vpop.f32.mrb[0].mxu0
    %2158 = vdwg.mxu0
    %2159 = vmatprep.subr.bf16.mxu0 %v1897
    %2160 = vmatpush1.bf16.msra.mxu0 %v1896
    %2161 = vmatprep.subr.bf16.mxu0 %v1904
    %2162 = vmatpush1.bf16.msra.mxu0 %v1903
    %2163 = vmatprep.subr.bf16.mxu0 %v1911
    %2164 = vmatpush1.bf16.msra.mxu0 %v1910
    %2165 = vmatprep.subr.bf16.mxu0 %v1918
    %2166 = vmatpush1.bf16.msra.mxu0 %v1917
    %2167 = vmatprep.subr.bf16.mxu0 %v1925
    %2168 = vmatpush1.bf16.msra.mxu0 %v1924
    %2169 = vmatprep.subr.bf16.mxu0 %v1932
    %2170 = vmatpush1.bf16.msra.mxu0 %v1931
    %2171 = vmatprep.subr.bf16.mxu0 %v1939
    %2172 = vmatpush1.bf16.msra.mxu0 %v1938
    %2173 = vmatprep.subr.bf16.mxu0 %v1946
    %2174 = vmatpush1.bf16.msra.mxu0 %v1945
    %2175 = vmatprep.subr.bf16.mxu0 %v1953
    %2176 = vmatpush1.bf16.msra.mxu0 %v1952
    %2177 = vmatprep.subr.bf16.mxu0 %v1960
    %2178 = vmatpush1.bf16.msra.mxu0 %v1959
    %2179 = vmatprep.subr.bf16.mxu0 %v1967
    %2180 = vmatpush1.bf16.msra.mxu0 %v1966
    %2181 = vmatprep.subr.bf16.mxu0 %v1974
    %2182 = vmatpush1.bf16.msra.mxu0 %v1973
    %2183 = vmatprep.subr.bf16.mxu0 %v1981
    %2184 = vmatpush1.bf16.msra.mxu0 %v1980
    %2185 = vmatprep.subr.bf16.mxu0 %v1988
    %2186 = vmatpush1.bf16.msra.mxu0 %v1987
    %2187 = vmatprep.subr.bf16.mxu0 %v1995
    %2188 = vmatpush1.bf16.msra.mxu0 %v1994
    %2189 = vmatprep.subr.bf16.mxu0 %v2002
    %2190 = vmatpush1.bf16.msra.mxu0 %v2001
    %2191 = vmatprep.mubr.bf16.mxu0 %v1376
    %2192 = vmatmul.mubr.bf16.gmra.mrb[0].mxu0 %v1375
    %v2193 = vpop.f32.mrb[0].mxu0
    %v2194 = vadd.f32 %v1518, %v2193
    %v2195 = vpop.f32.mrb[0].mxu0
    %v2196 = vadd.f32 %v1522, %v2195
    %v2197 = vpop.f32.mrb[0].mxu0
    %v2198 = vpop.f32.mrb[0].mxu0
    %2199 = vdwg.mxu0
    %2200 = vmatprep.subr.bf16.mxu0 %v1899
    %2201 = vmatpush1.bf16.msra.mxu0 %v1898
    %2202 = vmatprep.subr.bf16.mxu0 %v1906
    %2203 = vmatpush1.bf16.msra.mxu0 %v1905
    %2204 = vmatprep.subr.bf16.mxu0 %v1913
    %2205 = vmatpush1.bf16.msra.mxu0 %v1912
    %2206 = vmatprep.subr.bf16.mxu0 %v1920
    %2207 = vmatpush1.bf16.msra.mxu0 %v1919
    %2208 = vmatprep.subr.bf16.mxu0 %v1927
    %2209 = vmatpush1.bf16.msra.mxu0 %v1926
    %2210 = vmatprep.subr.bf16.mxu0 %v1934
    %2211 = vmatpush1.bf16.msra.mxu0 %v1933
    %2212 = vmatprep.subr.bf16.mxu0 %v1941
    %2213 = vmatpush1.bf16.msra.mxu0 %v1940
    %2214 = vmatprep.subr.bf16.mxu0 %v1948
    %2215 = vmatpush1.bf16.msra.mxu0 %v1947
    %2216 = vmatprep.subr.bf16.mxu0 %v1955
    %2217 = vmatpush1.bf16.msra.mxu0 %v1954
    %2218 = vmatprep.subr.bf16.mxu0 %v1962
    %2219 = vmatpush1.bf16.msra.mxu0 %v1961
    %2220 = vmatprep.subr.bf16.mxu0 %v1969
    %2221 = vmatpush1.bf16.msra.mxu0 %v1968
    %2222 = vmatprep.subr.bf16.mxu0 %v1976
    %2223 = vmatpush1.bf16.msra.mxu0 %v1975
    %2224 = vmatprep.subr.bf16.mxu0 %v1983
    %2225 = vmatpush1.bf16.msra.mxu0 %v1982
    %2226 = vmatprep.subr.bf16.mxu0 %v1990
    %2227 = vmatpush1.bf16.msra.mxu0 %v1989
    %2228 = vmatprep.subr.bf16.mxu0 %v1997
    %2229 = vmatpush1.bf16.msra.mxu0 %v1996
    %2230 = vmatprep.subr.bf16.mxu0 %v2004
    %2231 = vmatpush1.bf16.msra.mxu0 %v2003
    %2232 = vmatprep.mubr.bf16.mxu0 %v1376
    %2233 = vmatmul.mubr.bf16.gmra.mrb[0].mxu0 %v1375
    %v2234 = vpop.f32.mrb[0].mxu0
    %v2235 = vadd.f32 %v1526, %v2234
    %v2236 = vpop.f32.mrb[0].mxu0
    %v2237 = vadd.f32 %v1530, %v2236
    %v2238 = vpop.f32.mrb[0].mxu0
    %v2239 = vpop.f32.mrb[0].mxu0
    %2240 = vdwg.mxu0
    %2241 = vmatprep.subr.bf16.mxu0 0
    %2242 = vmatpush1.bf16.msra.mxu0 %v1900
    %2243 = vmatprep.subr.bf16.mxu0 0
    %2244 = vmatpush1.bf16.msra.mxu0 %v1907
    %2245 = vmatprep.subr.bf16.mxu0 0
    %2246 = vmatpush1.bf16.msra.mxu0 %v1914
    %2247 = vmatprep.subr.bf16.mxu0 0
    %2248 = vmatpush1.bf16.msra.mxu0 %v1921
    %2249 = vmatprep.subr.bf16.mxu0 0
    %2250 = vmatpush1.bf16.msra.mxu0 %v1928
    %2251 = vmatprep.subr.bf16.mxu0 0
    %2252 = vmatpush1.bf16.msra.mxu0 %v1935
    %2253 = vmatprep.subr.bf16.mxu0 0
    %2254 = vmatpush1.bf16.msra.mxu0 %v1942
    %2255 = vmatprep.subr.bf16.mxu0 0
    %2256 = vmatpush1.bf16.msra.mxu0 %v1949
    %2257 = vmatprep.subr.bf16.mxu0 0
    %2258 = vmatpush1.bf16.msra.mxu0 %v1956
    %2259 = vmatprep.subr.bf16.mxu0 0
    %2260 = vmatpush1.bf16.msra.mxu0 %v1963
    %2261 = vmatprep.subr.bf16.mxu0 0
    %2262 = vmatpush1.bf16.msra.mxu0 %v1970
    %2263 = vmatprep.subr.bf16.mxu0 0
    %2264 = vmatpush1.bf16.msra.mxu0 %v1977
    %2265 = vmatprep.subr.bf16.mxu0 0
    %2266 = vmatpush1.bf16.msra.mxu0 %v1984
    %2267 = vmatprep.subr.bf16.mxu0 0
    %2268 = vmatpush1.bf16.msra.mxu0 %v1991
    %2269 = vmatprep.subr.bf16.mxu0 0
    %2270 = vmatpush1.bf16.msra.mxu0 %v1998
    %2271 = vmatprep.subr.bf16.mxu0 0
    %2272 = vmatpush1.bf16.msra.mxu0 %v2005
    %2273 = vmatprep.mubr.bf16.mxu0 %v1376
    %2274 = vmatmul.mubr.bf16.gmra.mrb[0].mxu0 %v1375
    %v2275 = vpop.f32.mrb[0].mxu0
    %v2276 = vadd.f32 %v1534, %v2275
    %v2277 = vpop.f32.mrb[0].mxu0
    %v2278 = vpop.f32.mrb[0].mxu0
    %v2279 = vpop.f32.mrb[0].mxu0
    %2280 = vdwg.mxu0
    %v2281 = vxor.u32 %v2153, 2147483648
    %v2282 = vxor.u32 %v2155, 2147483648
    %v2283 = vxor.u32 %v2194, 2147483648
    %v2284 = vxor.u32 %v2196, 2147483648
    %v2285 = vxor.u32 %v2235, 2147483648
    %v2286 = vxor.u32 %v2237, 2147483648
    %v2287 = vxor.u32 %v2276, 2147483648
    %v2288 = vmul.f32 %v2281, 1.442695
    %v2289 = vpow.pop %v2288
    %v2290 = vmul.f32 %v2282, 1.442695
    %v2291 = vpow.pop %v2290
    %v2292 = vmul.f32 %v2283, 1.442695
    %v2293 = vpow.pop %v2292
    %v2294 = vmul.f32 %v2284, 1.442695
    %v2295 = vpow.pop %v2294
    %v2296 = vmul.f32 %v2285, 1.442695
    %v2297 = vpow.pop %v2296
    %v2298 = vmul.f32 %v2286, 1.442695
    %v2299 = vpow.pop %v2298
    %v2300 = vmul.f32 %v2287, 1.442695
    %v2301 = vpow.pop %v2300
    %v2302 = vadd.f32 %v2289, 1.0
    %v2303 = vadd.f32 %v2291, 1.0
    %v2304 = vadd.f32 %v2293, 1.0
    %v2305 = vadd.f32 %v2295, 1.0
    %v2306 = vadd.f32 %v2297, 1.0
    %v2307 = vadd.f32 %v2299, 1.0
    %v2308 = vadd.f32 %v2301, 1.0
    %v2309 = vrcp.pop %v2302
    %v2310 = vmul.f32 1.0, %v2309
    %v2311 = vrcp.pop %v2303
    %v2312 = vmul.f32 1.0, %v2311
    %v2313 = vrcp.pop %v2304
    %v2314 = vmul.f32 1.0, %v2313
    %v2315 = vrcp.pop %v2305
    %v2316 = vmul.f32 1.0, %v2315
    %v2317 = vrcp.pop %v2306
    %v2318 = vmul.f32 1.0, %v2317
    %v2319 = vrcp.pop %v2307
    %v2320 = vmul.f32 1.0, %v2319
    %v2321 = vrcp.pop %v2308
    %v2322 = vmul.f32 1.0, %v2321
    %v2323 = vpack.c.bf16 %v2310, %v2310
    %v2324 = vpack.c.bf16 %v2312, %v2312
    %v2325 = vpack.c.bf16 %v2314, %v2314
    %v2326 = vpack.c.bf16 %v2316, %v2316
    %v2327 = vpack.c.bf16 %v2318, %v2318
    %v2328 = vpack.c.bf16 %v2320, %v2320
    %v2329 = vpack.c.bf16 %v2322, %v2322
    %v2337 = vcombine.low %v2323, %v2324
    %v2338 = vcombine.low %v2325, %v2326
    %v2339 = vcombine.low %v2327, %v2328
    %v2341 = vunpack.c.l.s4 1966171168
    %v2342 = vunpack.c.0.s8 %v2341
    %v2343 = vlaneseq
    %v2344 = vshrl.u32 %v2343, 7
    %v2345 = vsub.s32 %v2342, %v2344
    %v2346 = vrot.slane %v2337, %v2345
    %v2348 = vunpack.c.l.s4 1966171168
    %v2349 = vunpack.c.0.s8 %v2348
    %v2350 = vlaneseq
    %v2351 = vshrl.u32 %v2350, 7
    %v2352 = vsub.s32 %v2349, %v2351
    %v2353 = vrot.slane %v2338, %v2352
    %v2355 = vunpack.c.l.s4 1966171168
    %v2356 = vunpack.c.0.s8 %v2355
    %v2357 = vlaneseq
    %v2358 = vshrl.u32 %v2357, 7
    %v2359 = vsub.s32 %v2356, %v2358
    %v2360 = vrot.slane %v2339, %v2359
    %v2362 = vunpack.c.l.s4 1966171168
    %v2363 = vunpack.c.0.s8 %v2362
    %v2364 = vlaneseq
    %v2365 = vshrl.u32 %v2364, 7
    %v2366 = vsub.s32 %v2363, %v2365
    %v2367 = vrot.slane %v2329, %v2366
    %v2368 = vcombine.low %v2346, %v2353
    %v2369 = vcombine.low %v2360, %v2367
    %v2371 = vunpack.c.l.s4 1966171168
    %v2372 = vunpack.c.0.s8 %v2371
    %v2373 = vlaneseq
    %v2374 = vshrl.u32 %v2373, 7
    %v2375 = vsub.s32 %v2372, %v2374
    %v2376 = vrot.slane %v2368, %v2375
    %v2378 = vunpack.c.l.s4 1966171168
    %v2379 = vunpack.c.0.s8 %v2378
    %v2380 = vlaneseq
    %v2381 = vshrl.u32 %v2380, 7
    %v2382 = vsub.s32 %v2379, %v2381
    %v2383 = vrot.slane %v2369, %v2382
    %v2384 = vcombine.low %v2376, %v2383
    %vm2386 = vcmask 1040384
    %vm2387 = vcmask 1041409
    %vm2388 = vmor %vm2387, %vm2386
    %vm2389 = vcmask 1042434
    %vm2390 = vmor %vm2389, %vm2388
    %vm2391 = vcmask 1043459
    %vm2392 = vmor %vm2391, %vm2390
    %vm2393 = vcmask 1044484
    %vm2394 = vmor %vm2393, %vm2392
    %vm2395 = vcmask 1045509
    %vm2396 = vmor %vm2395, %vm2394
    %vm2397 = vcmask 129030
    %vm2398 = vmor %vm2397, %vm2396
    %2399 = vst.msk [vmem:[#allocation2] sm:$0x7f] %vm2398, %v2384
    // Predicated region
    $region58: #{vae_forward.1} parent=1 // pred_check
      _
    $region59: #{vae_forward.1} parent=1 // pred_check_branch
      %2401 = sbr.rel (0) target = $region61
    $region60: #{vae_forward.1} parent=1 // pred_region
      _
    $region61: #{vae_forward.1} parent=1 // pred_fallthru
      _
    // Predicated region
    $region62: #{vae_forward.1} parent=1 // pred_check
      _
    $region63: #{vae_forward.1} parent=1 // pred_check_branch
      %2403 = sbr.rel (0) target = $region65
    $region64: #{vae_forward.1} parent=1 // pred_region
      %s2405 = ssub.s32 112, 112
      %2406 = vsyncadd [#allocation3], %s2405
      %s2408 = sshll.u32 [#allocation2], 4
      %s2409 = int_to_ptr.vmem [resolvable:$true] %s2408
      %2411 = dma.vmem_to_hbm [thread:$0]  %s2409, 112, %s15, [#allocation3]
    $region65: #{vae_forward.1} parent=1 // pred_fallthru
      _
    // Predicated region
    $region66: #{vae_forward.1} parent=1 // pred_check
      _
    $region67: #{vae_forward.1} parent=1 // pred_check_branch
      %2413 = sbr.rel (0) target = $region69
    $region68: #{vae_forward.1} parent=1 // pred_region
      _
    $region69: #{vae_forward.1} parent=1 // pred_fallthru
      _
    // Predicated region
    $region70: #{vae_forward.1} parent=1 // pred_check
      _
    $region71: #{vae_forward.1} parent=1 // pred_check_branch
      %2415 = sbr.rel (0) target = $region73
    $region72: #{vae_forward.1} parent=1 // pred_region
      %2416 = dma.done [#allocation3], 112
    $region73: #{vae_forward.1} parent=1 // pred_fallthru
      _
    %2417 = vsyncpa [#allocation3], 1

</llo_original>
